<compile_context>
chip_gen: v6e
topology: v6e:2x2x1
jax: 0.10.0
libtpu: 0.0.40
codegen_flags: <defaults>
</compile_context>

<pallas_src>
import jax
import jax.numpy as jnp
from jax.experimental import pallas as pl
from jax.experimental.pallas import tpu as pltpu

# ----------------------------- config (small) -------------------------------
VOCAB = 64
B = 2                          # batch
S = 8                          # sequence length (pad_size)
H = 32                         # hidden_size
FF = 4 * H                     # feed-forward size
NUM_FILTERS = 4
FILTER_SIZES = (2, 3, 4)
KMAX = max(FILTER_SIZES)       # filters zero-padded to this length
NUM_CLASSES = 2                # cheng() requires exactly 2 classes
D_CNN = NUM_FILTERS * len(FILTER_SIZES)
OUT_W = 2 * NUM_CLASSES + 4    # out1(2) | out2(2) | out3(4)

# -------------------- packed parameter slab row layout ----------------------
# One (ROWS, 128) f32 slab; all starts 8-aligned for clean sublane layout.
R_WORD = 0                      # 64 rows : word_emb          cols [0,H)
R_POS = 64                      # 8  rows : pos_emb           cols [0,H)
R_TYPE = 72                     # 2  rows : type_emb          cols [0,H)
R_LN = 80                       # 8  rows : g0,b0,g1,b1,g2,b2,attn_out_b,ffn_out_b
R_QKV = 88                      # 32 rows weight (cols [0,3H)) + bias row at R_QKV+H
R_WO = 128                      # 32 rows : attention output proj
R_W1 = 160                      # 32 rows weight (cols [0,FF)) + bias row at R_W1+H
R_W2 = 200                      # 128 rows: FFN down proj      cols [0,H)
R_CONV = 328                    # 4*H rows (per-offset conv weights, cols [0,D_CNN))
                                #   + bias row at R_CONV + KMAX*H
R_CMASK = 464                   # 8 rows  : conv validity mask cols [0,D_CNN)
R_FC = 472                      # 12 rows weight (cols [0,2C)) + bias row at R_FC+D_CNN
ROWS = 488


# ----------------------- single fused Pallas kernel --------------------------
def fused_kernel(ints_ref, w_ref, out_ref):
    f32 = jnp.float32
    W = w_ref  # packed parameter slab (ROWS, 128), static slices only

    ints = ints_ref[0]                          # (S, 4) int32 for this example
    ctx_ids = ints[:, 0:1]                      # (S, 1) token ids
    typ_ids = ints[:, 1:2]                      # (S, 1) segment ids (0/1)
    msk = ints[:, 2:3].astype(f32)              # (S, 1) key mask

    # ---- embeddings: one-hot gather on the MXU (no wrapper gather op) ------
    vocab_iota = jax.lax.broadcasted_iota(jnp.int32, (S, VOCAB), 1)
    onehot = (ctx_ids == vocab_iota).astype(f32)                     # (S, VOCAB)
    x = jnp.dot(onehot, W[R_WORD:R_WORD + VOCAB, 0:H],
                preferred_element_type=f32)                          # (S, H)
    type0 = W[R_TYPE:R_TYPE + 1, 0:H]
    type1 = W[R_TYPE + 1:R_TYPE + 2, 0:H]
    x = x + jnp.where(typ_ids == 0, type0, type1)                    # (S, H)
    x = x + W[R_POS:R_POS + S, 0:H]

    def layer_norm(v, g, b):
        mu = jnp.mean(v, axis=-1, keepdims=True)
        var = jnp.mean((v - mu) ** 2, axis=-1, keepdims=True)
        return (v - mu) * jax.lax.rsqrt(var + 1e-12) * g + b

    ln = W[R_LN:R_LN + 8, 0:H]
    g0, b0 = ln[0:1, :], ln[1:2, :]
    g1, b1 = ln[2:3, :], ln[3:4, :]
    g2, b2 = ln[4:5, :], ln[5:6, :]
    bo, b2f = ln[6:7, :], ln[7:8, :]

    x = layer_norm(x, g0, b0)                                        # embedding LN

    # ---- single-head self-attention (fused QKV matmul) ---------------------
    qkv = jnp.dot(x, W[R_QKV:R_QKV + H, 0:3 * H],
                  preferred_element_type=f32) + W[R_QKV + H:R_QKV + H + 1, 0:3 * H]
    q = qkv[:, 0:H]
    k = qkv[:, H:2 * H]
    v = qkv[:, 2 * H:3 * H]

    # key mask as a lane-oriented row vector, built with iota/select/reduce
    # (avoids a transpose and avoids a K=1 matmul).
    rows_i = jax.lax.broadcasted_iota(jnp.int32, (S, S), 0)
    cols_i = jax.lax.broadcasted_iota(jnp.int32, (S, S), 1)
    eye_f = (rows_i == cols_i).astype(f32)                           # (S, S)
    mask_lane = jnp.sum(eye_f * msk, axis=0, keepdims=True)          # (1, S) = mask[j]
    key_bias = (mask_lane - 1.0) * 1e9                               # 0 or -1e9

    # single implicit k^T via dot_general; accepted (tiny, one-off)
    scores = jax.lax.dot_general(q, k, (((1,), (1,)), ((), ())),
                                 preferred_element_type=f32) * (1.0 / float(H) ** 0.5)
    scores = scores + key_bias
    scores = scores - jnp.max(scores, axis=-1, keepdims=True)
    p = jnp.exp(scores)
    p = p / jnp.sum(p, axis=-1, keepdims=True)                       # exact softmax
    ctx = jnp.dot(p, v, preferred_element_type=f32)                  # (S, H)

    attn_out = jnp.dot(ctx, W[R_WO:R_WO + H, 0:H], preferred_element_type=f32) + bo
    h = layer_norm(x + attn_out, g1, b1)

    # ---- feed-forward -------------------------------------------------------
    ff = jnp.dot(h, W[R_W1:R_W1 + H, 0:FF],
                 preferred_element_type=f32) + W[R_W1 + H:R_W1 + H + 1, 0:FF]
    ff = jax.nn.gelu(ff, approximate=True)  # TODO(synk): HF BERT uses exact erf GELU
    ff = jnp.dot(ff, W[R_W2:R_W2 + FF, 0:H], preferred_element_type=f32) + b2f
    enc = layer_norm(h + ff, g2, b2)                                 # (S, H)

    # ---- TextCNN: accumulated per-offset dots (no unfold / lane concat) ----
    enc_pad = jnp.concatenate([enc, jnp.zeros((KMAX - 1, H), f32)], axis=0)
    y = jnp.dot(enc_pad[0:S, :], W[R_CONV:R_CONV + H, 0:D_CNN],
                preferred_element_type=f32)
    y = y + W[R_CONV + KMAX * H:R_CONV + KMAX * H + 1, 0:D_CNN]      # conv bias
    for j in range(1, KMAX):
        wj = W[R_CONV + j * H:R_CONV + (j + 1) * H, 0:D_CNN]
        y = y + jnp.dot(enc_pad[j:j + S, :], wj, preferred_element_type=f32)
    # ReLU then zero invalid window positions (ReLU >= 0 makes zeroing safe),
    # then max-pool over the sequence.
    y = jnp.maximum(y, 0.0) * W[R_CMASK:R_CMASK + S, 0:D_CNN]        # (S, D_CNN)
    pooled = jnp.max(y, axis=0, keepdims=True)                       # (1, D_CNN)

    # ---- both fc heads in one matmul (dropout = identity in eval) ----------
    logits = jnp.dot(pooled, W[R_FC:R_FC + D_CNN, 0:2 * NUM_CLASSES],
                     preferred_element_type=f32)
    logits = logits + W[R_FC + D_CNN:R_FC + D_CNN + 1, 0:2 * NUM_CLASSES]  # (1, 2C)

    def softmax(l):
        l = l - jnp.max(l, axis=1, keepdims=True)
        e = jnp.exp(l)
        return e / jnp.sum(e, axis=1, keepdims=True)

    out1 = softmax(logits[:, 0:NUM_CLASSES])
    out2 = softmax(logits[:, NUM_CLASSES:2 * NUM_CLASSES])

    # cheng(): outer product of the two 2-class distributions
    a0, a1 = out1[:, 0:1], out1[:, 1:2]
    c0, c1 = out2[:, 0:1], out2[:, 1:2]
    out3 = jnp.concatenate([a0 * c0, a0 * c1, a1 * c0, a1 * c1], axis=1)

    out_ref[0] = jnp.concatenate([out1, out2, out3], axis=1).astype(out_ref.dtype)


def fused_forward(ints, slab):
    # Grid over the batch; "parallel" lets v7x split examples across its two
    # TensorCores.  Parameter slab block index is constant -> fetched once.
    return pl.pallas_call(
        fused_kernel,
        out_shape=jax.ShapeDtypeStruct((B, 1, OUT_W), jnp.float32),
        grid=(B,),
        in_specs=[
            pl.BlockSpec((1, S, 4), lambda b: (b, 0, 0)),
            pl.BlockSpec((ROWS, 128), lambda b: (0, 0)),
        ],
        out_specs=pl.BlockSpec((1, 1, OUT_W), lambda b: (b, 0, 0)),
        compiler_params=pltpu.CompilerParams(dimension_semantics=("parallel",)),
    )(ints, slab)


# ------------------------------- parameters ----------------------------------
def make_params(key):
    ks = jax.random.split(key, 14)
    it = iter(range(14))

    def n(shape, s=0.02):
        return jax.random.normal(ks[next(it)], shape, jnp.float32) * s

    W = jnp.zeros((ROWS, 128), jnp.float32)

    # embeddings
    W = W.at[R_WORD:R_WORD + VOCAB, 0:H].set(n((VOCAB, H)))
    W = W.at[R_POS:R_POS + S, 0:H].set(n((S, H)))
    W = W.at[R_TYPE:R_TYPE + 2, 0:H].set(n((2, H)))

    # LayerNorm vectors + residual-path biases: rows 0:g0 1:b0 2:g1 3:b1 4:g2 5:b2 6:bo 7:b2f
    ln = jnp.zeros((8, H), jnp.float32).at[0].set(1.0).at[2].set(1.0).at[4].set(1.0)
    W = W.at[R_LN:R_LN + 8, 0:H].set(ln)

    # fused QKV weight (bias row stays zero)
    qkv_w = jnp.concatenate([n((H, H)), n((H, H)), n((H, H))], axis=1)   # (H, 3H)
    W = W.at[R_QKV:R_QKV + H, 0:3 * H].set(qkv_w)

    W = W.at[R_WO:R_WO + H, 0:H].set(n((H, H)))
    W = W.at[R_W1:R_W1 + H, 0:FF].set(n((H, FF)))
    W = W.at[R_W2:R_W2 + FF, 0:H].set(n((FF, H)))

    # conv filters: torch Conv2d weight (F, 1, k, H) -> per-offset (H, F) blocks,
    # zero-padded to KMAX offsets; columns grouped by filter size.
    for gi, kf in enumerate(FILTER_SIZES):
        wk = n((NUM_FILTERS, 1, kf, H), 0.1)                             # (F,1,k,H)
        for j in range(kf):
            W = W.at[R_CONV + j * H:R_CONV + (j + 1) * H,
                     gi * NUM_FILTERS:(gi + 1) * NUM_FILTERS].set(wk[:, 0, j, :].T)
    # conv bias row (R_CONV + KMAX*H) stays zero

    # conv validity mask: output position i valid for filter size k iff i <= S-k
    pos = jnp.arange(S)[:, None]
    kvec = jnp.array([kf for kf in FILTER_SIZES for _ in range(NUM_FILTERS)],
                     jnp.int32)[None, :]
    cmask = (pos <= (S - kvec)).astype(jnp.float32)                      # (S, D_CNN)
    W = W.at[R_CMASK:R_CMASK + S, 0:D_CNN].set(cmask)

    # both fc heads packed: torch Linear weight (C, D) stored transposed (D, C)
    fc_w = jnp.concatenate([n((NUM_CLASSES, D_CNN), 0.1).T,
                            n((NUM_CLASSES, D_CNN), 0.1).T], axis=1)     # (D, 2C)
    W = W.at[R_FC:R_FC + D_CNN, 0:2 * NUM_CLASSES].set(fc_w)
    # fc bias row stays zero
    return W


# --------------------------------- forward -----------------------------------
@jax.jit
def forward(slab, context, types, mask):
    # single tiny int op: pack context/types/mask into one (B, S, 4) int32 slab;
    # gather + attention mask are built inside the kernel.
    ints = jnp.stack([context, types, mask, jnp.zeros_like(context)],
                     axis=-1).astype(jnp.int32)                          # (B, S, 4)
    out = fused_forward(ints, slab)[:, 0, :]                             # (B, 8)
    out1 = out[:, 0:NUM_CLASSES]
    out2 = out[:, NUM_CLASSES:2 * NUM_CLASSES]
    out3 = out[:, 2 * NUM_CLASSES:2 * NUM_CLASSES + 4]
    return out1, out2, out3


if __name__ == "__main__":
    key = jax.random.PRNGKey(0)
    pkey, ckey = jax.random.split(key)
    slab = make_params(pkey)

    context = jax.random.randint(ckey, (B, S), 0, VOCAB, dtype=jnp.int32)
    types = jnp.zeros((B, S), jnp.int32)
    mask = jnp.array([[1] * S, [1] * (S - 2) + [0, 0]], jnp.int32)

    out1, out2, out3 = forward(slab, context, types, mask)
    jax.block_until_ready((out1, out2, out3))

    assert out1.shape == (B, NUM_CLASSES)
    assert out2.shape == (B, NUM_CLASSES)
    assert out3.shape == (B, 4)
    assert bool(jnp.all(jnp.isfinite(out3)))
    print("KERNEL_OK")
</pallas_src>

<mosaic_0001>
module attributes {stable_mosaic.version = 11 : i64} {
  func.func @fused_kernel(%arg0: i32, %arg1: memref<1x8x4xi32, #tpu.memory_space<vmem>>, %arg2: memref<488x128xf32, #tpu.memory_space<vmem>>, %arg3: memref<1x1x8xf32, #tpu.memory_space<vmem>>) attributes {dimension_semantics = [#tpu.dimension_semantics<parallel>], iteration_bounds = array<i64: 2>, scalar_prefetch = 0 : i64, scratch_operands = 0 : i64, tpu.core_type = #tpu.core_type<tc>, window_params = [{transform_indices = @transform_0, window_bounds = array<i64: 1, 8, 4>}, {pipeline_mode = #tpu.pipeline_mode<synchronous>, transform_indices = @transform_1, window_bounds = array<i64: 488, 128>}, {transform_indices = @transform_2, window_bounds = array<i64: 1, 1, 8>}]} {
    %c0 = arith.constant 0 : index
    %c0_0 = arith.constant 0 : index
    %c0_1 = arith.constant 0 : index
    %0 = vector.load %arg1[%c0, %c0_0, %c0_1] : memref<1x8x4xi32, #tpu.memory_space<vmem>>, vector<1x8x4xi32>
    %1 = vector.shape_cast %0 : vector<1x8x4xi32> to vector<8x4xi32>
    %2 = vector.extract_strided_slice %1 {offsets = [0, 0], sizes = [8, 1], strides = [1, 1]} : vector<8x4xi32> to vector<8x1xi32>
    %3 = vector.extract_strided_slice %1 {offsets = [0, 1], sizes = [8, 1], strides = [1, 1]} : vector<8x4xi32> to vector<8x1xi32>
    %4 = vector.extract_strided_slice %1 {offsets = [0, 2], sizes = [8, 1], strides = [1, 1]} : vector<8x4xi32> to vector<8x1xi32>
    %5 = arith.sitofp %4 : vector<8x1xi32> to vector<8x1xf32>
    %6 = tpu.iota {dimensions = array<i32: 1>} : vector<8x64xi32>
    %7 = vector.broadcast %2 : vector<8x1xi32> to vector<8x64xi32>
    %8 = arith.cmpi eq, %7, %6 : vector<8x64xi32>
    %9 = arith.extui %8 : vector<8x64xi1> to vector<8x64xi32>
    %10 = arith.sitofp %9 : vector<8x64xi32> to vector<8x64xf32>
    %c0_2 = arith.constant 0 : index
    %c0_3 = arith.constant 0 : index
    %11 = vector.load %arg2[%c0_2, %c0_3] : memref<488x128xf32, #tpu.memory_space<vmem>>, vector<64x32xf32>
    %cst = arith.constant dense<0.000000e+00> : vector<8x32xf32>
    %12 = tpu.matmul %10, %11, %cst {dimension_numbers = #tpu.dot_dimension_numbers<[1], [0], [0], [1], [0, 0, 1, 1], [], []>} : vector<8x64xf32>, vector<64x32xf32>, vector<8x32xf32> -> vector<8x32xf32>
    %c72 = arith.constant 72 : index
    %c0_4 = arith.constant 0 : index
    %13 = vector.load %arg2[%c72, %c0_4] : memref<488x128xf32, #tpu.memory_space<vmem>>, vector<1x32xf32>
    %c73 = arith.constant 73 : index
    %c0_5 = arith.constant 0 : index
    %14 = vector.load %arg2[%c73, %c0_5] : memref<488x128xf32, #tpu.memory_space<vmem>>, vector<1x32xf32>
    %c0_i32 = arith.constant 0 : i32
    %15 = vector.broadcast %c0_i32 : i32 to vector<8x1xi32>
    %16 = arith.cmpi eq, %3, %15 : vector<8x1xi32>
    %17 = vector.shape_cast %16 : vector<8x1xi1> to vector<8x1xi1>
    %18 = vector.broadcast %17 : vector<8x1xi1> to vector<8x32xi1>
    %19 = vector.shape_cast %13 : vector<1x32xf32> to vector<1x32xf32>
    %20 = vector.broadcast %19 : vector<1x32xf32> to vector<8x32xf32>
    %21 = vector.shape_cast %14 : vector<1x32xf32> to vector<1x32xf32>
    %22 = vector.broadcast %21 : vector<1x32xf32> to vector<8x32xf32>
    %23 = arith.select %18, %20, %22 : vector<8x32xi1>, vector<8x32xf32>
    %24 = arith.addf %12, %23 : vector<8x32xf32>
    %c64 = arith.constant 64 : index
    %c0_6 = arith.constant 0 : index
    %25 = vector.load %arg2[%c64, %c0_6] : memref<488x128xf32, #tpu.memory_space<vmem>>, vector<8x32xf32>
    %26 = arith.addf %24, %25 : vector<8x32xf32>
    %c80 = arith.constant 80 : index
    %c0_7 = arith.constant 0 : index
    %27 = vector.load %arg2[%c80, %c0_7] : memref<488x128xf32, #tpu.memory_space<vmem>>, vector<8x32xf32>
    %28 = vector.extract_strided_slice %27 {offsets = [0, 0], sizes = [1, 32], strides = [1, 1]} : vector<8x32xf32> to vector<1x32xf32>
    %29 = vector.extract_strided_slice %27 {offsets = [1, 0], sizes = [1, 32], strides = [1, 1]} : vector<8x32xf32> to vector<1x32xf32>
    %30 = vector.extract_strided_slice %27 {offsets = [2, 0], sizes = [1, 32], strides = [1, 1]} : vector<8x32xf32> to vector<1x32xf32>
    %31 = vector.extract_strided_slice %27 {offsets = [3, 0], sizes = [1, 32], strides = [1, 1]} : vector<8x32xf32> to vector<1x32xf32>
    %32 = vector.extract_strided_slice %27 {offsets = [4, 0], sizes = [1, 32], strides = [1, 1]} : vector<8x32xf32> to vector<1x32xf32>
    %33 = vector.extract_strided_slice %27 {offsets = [5, 0], sizes = [1, 32], strides = [1, 1]} : vector<8x32xf32> to vector<1x32xf32>
    %34 = vector.extract_strided_slice %27 {offsets = [6, 0], sizes = [1, 32], strides = [1, 1]} : vector<8x32xf32> to vector<1x32xf32>
    %35 = vector.extract_strided_slice %27 {offsets = [7, 0], sizes = [1, 32], strides = [1, 1]} : vector<8x32xf32> to vector<1x32xf32>
    %cst_8 = arith.constant dense<0.000000e+00> : vector<8xf32>
    %36 = vector.multi_reduction <add>, %26, %cst_8 [1] : vector<8x32xf32> to vector<8xf32>
    %37 = vector.shape_cast %36 : vector<8xf32> to vector<8x1xf32>
    %cst_9 = arith.constant 3.200000e+01 : f32
    %38 = vector.broadcast %cst_9 : f32 to vector<8x1xf32>
    %39 = arith.divf %37, %38 : vector<8x1xf32>
    %40 = vector.broadcast %39 : vector<8x1xf32> to vector<8x32xf32>
    %41 = arith.subf %26, %40 : vector<8x32xf32>
    %42 = arith.mulf %41, %41 : vector<8x32xf32>
    %cst_10 = arith.constant dense<0.000000e+00> : vector<8xf32>
    %43 = vector.multi_reduction <add>, %42, %cst_10 [1] : vector<8x32xf32> to vector<8xf32>
    %44 = vector.shape_cast %43 : vector<8xf32> to vector<8x1xf32>
    %cst_11 = arith.constant 3.200000e+01 : f32
    %45 = vector.broadcast %cst_11 : f32 to vector<8x1xf32>
    %46 = arith.divf %44, %45 : vector<8x1xf32>
    %47 = vector.broadcast %39 : vector<8x1xf32> to vector<8x32xf32>
    %48 = arith.subf %26, %47 : vector<8x32xf32>
    %cst_12 = arith.constant 9.99999996E-13 : f32
    %49 = vector.broadcast %cst_12 : f32 to vector<8x1xf32>
    %50 = arith.addf %46, %49 : vector<8x1xf32>
    %51 = math.rsqrt %50 : vector<8x1xf32>
    %52 = vector.broadcast %51 : vector<8x1xf32> to vector<8x32xf32>
    %53 = arith.mulf %48, %52 : vector<8x32xf32>
    %54 = vector.broadcast %28 : vector<1x32xf32> to vector<8x32xf32>
    %55 = arith.mulf %53, %54 : vector<8x32xf32>
    %56 = vector.broadcast %29 : vector<1x32xf32> to vector<8x32xf32>
    %57 = arith.addf %55, %56 : vector<8x32xf32>
    %c88 = arith.constant 88 : index
    %c0_13 = arith.constant 0 : index
    %58 = vector.load %arg2[%c88, %c0_13] : memref<488x128xf32, #tpu.memory_space<vmem>>, vector<32x96xf32>
    %cst_14 = arith.constant dense<0.000000e+00> : vector<8x96xf32>
    %59 = tpu.matmul %57, %58, %cst_14 {dimension_numbers = #tpu.dot_dimension_numbers<[1], [0], [0], [1], [0, 0, 1, 1], [], []>} : vector<8x32xf32>, vector<32x96xf32>, vector<8x96xf32> -> vector<8x96xf32>
    %c120 = arith.constant 120 : index
    %c0_15 = arith.constant 0 : index
    %60 = vector.load %arg2[%c120, %c0_15] : memref<488x128xf32, #tpu.memory_space<vmem>>, vector<1x96xf32>
    %61 = vector.broadcast %60 : vector<1x96xf32> to vector<8x96xf32>
    %62 = arith.addf %59, %61 : vector<8x96xf32>
    %63 = vector.extract_strided_slice %62 {offsets = [0, 0], sizes = [8, 32], strides = [1, 1]} : vector<8x96xf32> to vector<8x32xf32>
    %64 = vector.extract_strided_slice %62 {offsets = [0, 32], sizes = [8, 32], strides = [1, 1]} : vector<8x96xf32> to vector<8x32xf32>
    %65 = vector.extract_strided_slice %62 {offsets = [0, 64], sizes = [8, 32], strides = [1, 1]} : vector<8x96xf32> to vector<8x32xf32>
    %66 = tpu.iota {dimensions = array<i32: 0>} : vector<8x8xi32>
    %67 = tpu.iota {dimensions = array<i32: 1>} : vector<8x8xi32>
    %68 = arith.cmpi eq, %66, %67 : vector<8x8xi32>
    %69 = arith.extui %68 : vector<8x8xi1> to vector<8x8xi32>
    %70 = arith.sitofp %69 : vector<8x8xi32> to vector<8x8xf32>
    %71 = vector.broadcast %5 : vector<8x1xf32> to vector<8x8xf32>
    %72 = arith.mulf %70, %71 : vector<8x8xf32>
    %cst_16 = arith.constant dense<0.000000e+00> : vector<8xf32>
    %73 = vector.multi_reduction <add>, %72, %cst_16 [0] : vector<8x8xf32> to vector<8xf32>
    %74 = vector.shape_cast %73 : vector<8xf32> to vector<1x8xf32>
    %cst_17 = arith.constant 1.000000e+00 : f32
    %75 = vector.broadcast %cst_17 : f32 to vector<1x8xf32>
    %76 = arith.subf %74, %75 : vector<1x8xf32>
    %cst_18 = arith.constant 1.000000e+09 : f32
    %77 = vector.broadcast %cst_18 : f32 to vector<1x8xf32>
    %78 = arith.mulf %76, %77 : vector<1x8xf32>
    %cst_19 = arith.constant dense<0.000000e+00> : vector<8x8xf32>
    %79 = tpu.matmul %63, %64, %cst_19 {dimension_numbers = #tpu.dot_dimension_numbers<[1], [1], [0], [0], [0, 0, 1, 0], [], []>} : vector<8x32xf32>, vector<8x32xf32>, vector<8x8xf32> -> vector<8x8xf32>
    %cst_20 = arith.constant 0.176776692 : f32
    %80 = vector.broadcast %cst_20 : f32 to vector<8x8xf32>
    %81 = arith.mulf %79, %80 : vector<8x8xf32>
    %82 = vector.broadcast %78 : vector<1x8xf32> to vector<8x8xf32>
    %83 = arith.addf %81, %82 : vector<8x8xf32>
    %cst_21 = arith.constant dense<0xFF800000> : vector<8xf32>
    %84 = vector.multi_reduction <maximumf>, %83, %cst_21 [1] : vector<8x8xf32> to vector<8xf32>
    %85 = vector.shape_cast %84 : vector<8xf32> to vector<8x1xf32>
    %86 = vector.broadcast %85 : vector<8x1xf32> to vector<8x8xf32>
    %87 = arith.subf %83, %86 : vector<8x8xf32>
    %88 = math.exp %87 : vector<8x8xf32>
    %cst_22 = arith.constant dense<0.000000e+00> : vector<8xf32>
    %89 = vector.multi_reduction <add>, %88, %cst_22 [1] : vector<8x8xf32> to vector<8xf32>
    %90 = vector.shape_cast %89 : vector<8xf32> to vector<8x1xf32>
    %91 = vector.broadcast %90 : vector<8x1xf32> to vector<8x8xf32>
    %92 = arith.divf %88, %91 : vector<8x8xf32>
    %cst_23 = arith.constant dense<0.000000e+00> : vector<8x32xf32>
    %93 = tpu.matmul %92, %65, %cst_23 {dimension_numbers = #tpu.dot_dimension_numbers<[1], [0], [0], [1], [0, 0, 1, 1], [], []>} : vector<8x8xf32>, vector<8x32xf32>, vector<8x32xf32> -> vector<8x32xf32>
    %c128 = arith.constant 128 : index
    %c0_24 = arith.constant 0 : index
    %94 = vector.load %arg2[%c128, %c0_24] : memref<488x128xf32, #tpu.memory_space<vmem>>, vector<32x32xf32>
    %cst_25 = arith.constant dense<0.000000e+00> : vector<8x32xf32>
    %95 = tpu.matmul %93, %94, %cst_25 {dimension_numbers = #tpu.dot_dimension_numbers<[1], [0], [0], [1], [0, 0, 1, 1], [], []>} : vector<8x32xf32>, vector<32x32xf32>, vector<8x32xf32> -> vector<8x32xf32>
    %96 = vector.broadcast %34 : vector<1x32xf32> to vector<8x32xf32>
    %97 = arith.addf %95, %96 : vector<8x32xf32>
    %98 = arith.addf %57, %97 : vector<8x32xf32>
    %cst_26 = arith.constant dense<0.000000e+00> : vector<8xf32>
    %99 = vector.multi_reduction <add>, %98, %cst_26 [1] : vector<8x32xf32> to vector<8xf32>
    %100 = vector.shape_cast %99 : vector<8xf32> to vector<8x1xf32>
    %cst_27 = arith.constant 3.200000e+01 : f32
    %101 = vector.broadcast %cst_27 : f32 to vector<8x1xf32>
    %102 = arith.divf %100, %101 : vector<8x1xf32>
    %103 = vector.broadcast %102 : vector<8x1xf32> to vector<8x32xf32>
    %104 = arith.subf %98, %103 : vector<8x32xf32>
    %105 = arith.mulf %104, %104 : vector<8x32xf32>
    %cst_28 = arith.constant dense<0.000000e+00> : vector<8xf32>
    %106 = vector.multi_reduction <add>, %105, %cst_28 [1] : vector<8x32xf32> to vector<8xf32>
    %107 = vector.shape_cast %106 : vector<8xf32> to vector<8x1xf32>
    %cst_29 = arith.constant 3.200000e+01 : f32
    %108 = vector.broadcast %cst_29 : f32 to vector<8x1xf32>
    %109 = arith.divf %107, %108 : vector<8x1xf32>
    %110 = vector.broadcast %102 : vector<8x1xf32> to vector<8x32xf32>
    %111 = arith.subf %98, %110 : vector<8x32xf32>
    %cst_30 = arith.constant 9.99999996E-13 : f32
    %112 = vector.broadcast %cst_30 : f32 to vector<8x1xf32>
    %113 = arith.addf %109, %112 : vector<8x1xf32>
    %114 = math.rsqrt %113 : vector<8x1xf32>
    %115 = vector.broadcast %114 : vector<8x1xf32> to vector<8x32xf32>
    %116 = arith.mulf %111, %115 : vector<8x32xf32>
    %117 = vector.broadcast %30 : vector<1x32xf32> to vector<8x32xf32>
    %118 = arith.mulf %116, %117 : vector<8x32xf32>
    %119 = vector.broadcast %31 : vector<1x32xf32> to vector<8x32xf32>
    %120 = arith.addf %118, %119 : vector<8x32xf32>
    %c160 = arith.constant 160 : index
    %c0_31 = arith.constant 0 : index
    %121 = vector.load %arg2[%c160, %c0_31] : memref<488x128xf32, #tpu.memory_space<vmem>>, vector<32x128xf32>
    %cst_32 = arith.constant dense<0.000000e+00> : vector<8x128xf32>
    %122 = tpu.matmul %120, %121, %cst_32 {dimension_numbers = #tpu.dot_dimension_numbers<[1], [0], [0], [1], [0, 0, 1, 1], [], []>} : vector<8x32xf32>, vector<32x128xf32>, vector<8x128xf32> -> vector<8x128xf32>
    %c192 = arith.constant 192 : index
    %c0_33 = arith.constant 0 : index
    %123 = vector.load %arg2[%c192, %c0_33] : memref<488x128xf32, #tpu.memory_space<vmem>>, vector<1x128xf32>
    %124 = vector.broadcast %123 : vector<1x128xf32> to vector<8x128xf32>
    %125 = arith.addf %122, %124 : vector<8x128xf32>
    %126 = arith.mulf %125, %125 : vector<8x128xf32>
    %127 = arith.mulf %125, %126 : vector<8x128xf32>
    %cst_34 = arith.constant 4.471500e-02 : f32
    %128 = vector.broadcast %cst_34 : f32 to vector<8x128xf32>
    %129 = arith.mulf %128, %127 : vector<8x128xf32>
    %130 = arith.addf %125, %129 : vector<8x128xf32>
    %cst_35 = arith.constant 0.797884583 : f32
    %131 = vector.broadcast %cst_35 : f32 to vector<8x128xf32>
    %132 = arith.mulf %131, %130 : vector<8x128xf32>
    %133 = math.tanh %132 : vector<8x128xf32>
    %cst_36 = arith.constant 1.000000e+00 : f32
    %134 = vector.broadcast %cst_36 : f32 to vector<8x128xf32>
    %135 = arith.addf %134, %133 : vector<8x128xf32>
    %cst_37 = arith.constant 5.000000e-01 : f32
    %136 = vector.broadcast %cst_37 : f32 to vector<8x128xf32>
    %137 = arith.mulf %136, %135 : vector<8x128xf32>
    %138 = arith.mulf %125, %137 : vector<8x128xf32>
    %c200 = arith.constant 200 : index
    %c0_38 = arith.constant 0 : index
    %139 = vector.load %arg2[%c200, %c0_38] : memref<488x128xf32, #tpu.memory_space<vmem>>, vector<128x32xf32>
    %cst_39 = arith.constant dense<0.000000e+00> : vector<8x32xf32>
    %140 = tpu.matmul %138, %139, %cst_39 {dimension_numbers = #tpu.dot_dimension_numbers<[1], [0], [0], [1], [0, 0, 1, 1], [], []>} : vector<8x128xf32>, vector<128x32xf32>, vector<8x32xf32> -> vector<8x32xf32>
    %141 = vector.broadcast %35 : vector<1x32xf32> to vector<8x32xf32>
    %142 = arith.addf %140, %141 : vector<8x32xf32>
    %143 = arith.addf %120, %142 : vector<8x32xf32>
    %cst_40 = arith.constant dense<0.000000e+00> : vector<8xf32>
    %144 = vector.multi_reduction <add>, %143, %cst_40 [1] : vector<8x32xf32> to vector<8xf32>
    %145 = vector.shape_cast %144 : vector<8xf32> to vector<8x1xf32>
    %cst_41 = arith.constant 3.200000e+01 : f32
    %146 = vector.broadcast %cst_41 : f32 to vector<8x1xf32>
    %147 = arith.divf %145, %146 : vector<8x1xf32>
    %148 = vector.broadcast %147 : vector<8x1xf32> to vector<8x32xf32>
    %149 = arith.subf %143, %148 : vector<8x32xf32>
    %150 = arith.mulf %149, %149 : vector<8x32xf32>
    %cst_42 = arith.constant dense<0.000000e+00> : vector<8xf32>
    %151 = vector.multi_reduction <add>, %150, %cst_42 [1] : vector<8x32xf32> to vector<8xf32>
    %152 = vector.shape_cast %151 : vector<8xf32> to vector<8x1xf32>
    %cst_43 = arith.constant 3.200000e+01 : f32
    %153 = vector.broadcast %cst_43 : f32 to vector<8x1xf32>
    %154 = arith.divf %152, %153 : vector<8x1xf32>
    %155 = vector.broadcast %147 : vector<8x1xf32> to vector<8x32xf32>
    %156 = arith.subf %143, %155 : vector<8x32xf32>
    %cst_44 = arith.constant 9.99999996E-13 : f32
    %157 = vector.broadcast %cst_44 : f32 to vector<8x1xf32>
    %158 = arith.addf %154, %157 : vector<8x1xf32>
    %159 = math.rsqrt %158 : vector<8x1xf32>
    %160 = vector.broadcast %159 : vector<8x1xf32> to vector<8x32xf32>
    %161 = arith.mulf %156, %160 : vector<8x32xf32>
    %162 = vector.broadcast %32 : vector<1x32xf32> to vector<8x32xf32>
    %163 = arith.mulf %161, %162 : vector<8x32xf32>
    %164 = vector.broadcast %33 : vector<1x32xf32> to vector<8x32xf32>
    %165 = arith.addf %163, %164 : vector<8x32xf32>
    %cst_45 = arith.constant 0.000000e+00 : f32
    %166 = vector.broadcast %cst_45 : f32 to vector<3x32xf32>
    %167 = tpu.concatenate %165, %166 in 0 : vector<8x32xf32>, vector<3x32xf32> -> vector<11x32xf32>
    %168 = vector.extract_strided_slice %167 {offsets = [0, 0], sizes = [8, 32], strides = [1, 1]} : vector<11x32xf32> to vector<8x32xf32>
    %c328 = arith.constant 328 : index
    %c0_46 = arith.constant 0 : index
    %169 = vector.load %arg2[%c328, %c0_46] : memref<488x128xf32, #tpu.memory_space<vmem>>, vector<32x12xf32>
    %cst_47 = arith.constant dense<0.000000e+00> : vector<8x12xf32>
    %170 = tpu.matmul %168, %169, %cst_47 {dimension_numbers = #tpu.dot_dimension_numbers<[1], [0], [0], [1], [0, 0, 1, 1], [], []>} : vector<8x32xf32>, vector<32x12xf32>, vector<8x12xf32> -> vector<8x12xf32>
    %c456 = arith.constant 456 : index
    %c0_48 = arith.constant 0 : index
    %171 = vector.load %arg2[%c456, %c0_48] : memref<488x128xf32, #tpu.memory_space<vmem>>, vector<1x12xf32>
    %172 = vector.broadcast %171 : vector<1x12xf32> to vector<8x12xf32>
    %173 = arith.addf %170, %172 : vector<8x12xf32>
    %c360 = arith.constant 360 : index
    %c0_49 = arith.constant 0 : index
    %174 = vector.load %arg2[%c360, %c0_49] : memref<488x128xf32, #tpu.memory_space<vmem>>, vector<32x12xf32>
    %175 = vector.extract_strided_slice %167 {offsets = [1, 0], sizes = [8, 32], strides = [1, 1]} : vector<11x32xf32> to vector<8x32xf32>
    %cst_50 = arith.constant dense<0.000000e+00> : vector<8x12xf32>
    %176 = tpu.matmul %175, %174, %cst_50 {dimension_numbers = #tpu.dot_dimension_numbers<[1], [0], [0], [1], [0, 0, 1, 1], [], []>} : vector<8x32xf32>, vector<32x12xf32>, vector<8x12xf32> -> vector<8x12xf32>
    %177 = arith.addf %173, %176 : vector<8x12xf32>
    %c392 = arith.constant 392 : index
    %c0_51 = arith.constant 0 : index
    %178 = vector.load %arg2[%c392, %c0_51] : memref<488x128xf32, #tpu.memory_space<vmem>>, vector<32x12xf32>
    %179 = vector.extract_strided_slice %167 {offsets = [2, 0], sizes = [8, 32], strides = [1, 1]} : vector<11x32xf32> to vector<8x32xf32>
    %cst_52 = arith.constant dense<0.000000e+00> : vector<8x12xf32>
    %180 = tpu.matmul %179, %178, %cst_52 {dimension_numbers = #tpu.dot_dimension_numbers<[1], [0], [0], [1], [0, 0, 1, 1], [], []>} : vector<8x32xf32>, vector<32x12xf32>, vector<8x12xf32> -> vector<8x12xf32>
    %181 = arith.addf %177, %180 : vector<8x12xf32>
    %c424 = arith.constant 424 : index
    %c0_53 = arith.constant 0 : index
    %182 = vector.load %arg2[%c424, %c0_53] : memref<488x128xf32, #tpu.memory_space<vmem>>, vector<32x12xf32>
    %183 = vector.extract_strided_slice %167 {offsets = [3, 0], sizes = [8, 32], strides = [1, 1]} : vector<11x32xf32> to vector<8x32xf32>
    %cst_54 = arith.constant dense<0.000000e+00> : vector<8x12xf32>
    %184 = tpu.matmul %183, %182, %cst_54 {dimension_numbers = #tpu.dot_dimension_numbers<[1], [0], [0], [1], [0, 0, 1, 1], [], []>} : vector<8x32xf32>, vector<32x12xf32>, vector<8x12xf32> -> vector<8x12xf32>
    %185 = arith.addf %181, %184 : vector<8x12xf32>
    %cst_55 = arith.constant 0.000000e+00 : f32
    %186 = vector.broadcast %cst_55 : f32 to vector<8x12xf32>
    %187 = arith.maximumf %185, %186 : vector<8x12xf32>
    %c464 = arith.constant 464 : index
    %c0_56 = arith.constant 0 : index
    %188 = vector.load %arg2[%c464, %c0_56] : memref<488x128xf32, #tpu.memory_space<vmem>>, vector<8x12xf32>
    %189 = arith.mulf %187, %188 : vector<8x12xf32>
    %cst_57 = arith.constant dense<0xFF800000> : vector<12xf32>
    %190 = vector.multi_reduction <maximumf>, %189, %cst_57 [0] : vector<8x12xf32> to vector<12xf32>
    %191 = vector.shape_cast %190 : vector<12xf32> to vector<1x12xf32>
    %c472 = arith.constant 472 : index
    %c0_58 = arith.constant 0 : index
    %192 = vector.load %arg2[%c472, %c0_58] : memref<488x128xf32, #tpu.memory_space<vmem>>, vector<12x4xf32>
    %cst_59 = arith.constant dense<0.000000e+00> : vector<1x4xf32>
    %193 = tpu.matmul %191, %192, %cst_59 {dimension_numbers = #tpu.dot_dimension_numbers<[1], [0], [0], [1], [0, 0, 1, 1], [], []>} : vector<1x12xf32>, vector<12x4xf32>, vector<1x4xf32> -> vector<1x4xf32>
    %c484 = arith.constant 484 : index
    %c0_60 = arith.constant 0 : index
    %194 = vector.load %arg2[%c484, %c0_60] : memref<488x128xf32, #tpu.memory_space<vmem>>, vector<1x4xf32>
    %195 = arith.addf %193, %194 : vector<1x4xf32>
    %196 = vector.extract_strided_slice %195 {offsets = [0, 0], sizes = [1, 2], strides = [1, 1]} : vector<1x4xf32> to vector<1x2xf32>
    %cst_61 = arith.constant dense<0xFF800000> : vector<1xf32>
    %197 = vector.multi_reduction <maximumf>, %196, %cst_61 [1] : vector<1x2xf32> to vector<1xf32>
    %198 = vector.shape_cast %197 : vector<1xf32> to vector<1x1xf32>
    %199 = vector.broadcast %198 : vector<1x1xf32> to vector<1x2xf32>
    %200 = arith.subf %196, %199 : vector<1x2xf32>
    %201 = math.exp %200 : vector<1x2xf32>
    %cst_62 = arith.constant dense<0.000000e+00> : vector<1xf32>
    %202 = vector.multi_reduction <add>, %201, %cst_62 [1] : vector<1x2xf32> to vector<1xf32>
    %203 = vector.shape_cast %202 : vector<1xf32> to vector<1x1xf32>
    %204 = vector.broadcast %203 : vector<1x1xf32> to vector<1x2xf32>
    %205 = arith.divf %201, %204 : vector<1x2xf32>
    %206 = vector.extract_strided_slice %195 {offsets = [0, 2], sizes = [1, 2], strides = [1, 1]} : vector<1x4xf32> to vector<1x2xf32>
    %cst_63 = arith.constant dense<0xFF800000> : vector<1xf32>
    %207 = vector.multi_reduction <maximumf>, %206, %cst_63 [1] : vector<1x2xf32> to vector<1xf32>
    %208 = vector.shape_cast %207 : vector<1xf32> to vector<1x1xf32>
    %209 = vector.broadcast %208 : vector<1x1xf32> to vector<1x2xf32>
    %210 = arith.subf %206, %209 : vector<1x2xf32>
    %211 = math.exp %210 : vector<1x2xf32>
    %cst_64 = arith.constant dense<0.000000e+00> : vector<1xf32>
    %212 = vector.multi_reduction <add>, %211, %cst_64 [1] : vector<1x2xf32> to vector<1xf32>
    %213 = vector.shape_cast %212 : vector<1xf32> to vector<1x1xf32>
    %214 = vector.broadcast %213 : vector<1x1xf32> to vector<1x2xf32>
    %215 = arith.divf %211, %214 : vector<1x2xf32>
    %216 = vector.extract_strided_slice %205 {offsets = [0, 0], sizes = [1, 1], strides = [1, 1]} : vector<1x2xf32> to vector<1x1xf32>
    %217 = vector.extract_strided_slice %205 {offsets = [0, 1], sizes = [1, 1], strides = [1, 1]} : vector<1x2xf32> to vector<1x1xf32>
    %218 = vector.extract_strided_slice %215 {offsets = [0, 0], sizes = [1, 1], strides = [1, 1]} : vector<1x2xf32> to vector<1x1xf32>
    %219 = vector.extract_strided_slice %215 {offsets = [0, 1], sizes = [1, 1], strides = [1, 1]} : vector<1x2xf32> to vector<1x1xf32>
    %220 = arith.mulf %216, %218 : vector<1x1xf32>
    %221 = arith.mulf %216, %219 : vector<1x1xf32>
    %222 = arith.mulf %217, %218 : vector<1x1xf32>
    %223 = arith.mulf %217, %219 : vector<1x1xf32>
    %224 = tpu.concatenate %220, %221, %222, %223 in 1 : vector<1x1xf32>, vector<1x1xf32>, vector<1x1xf32>, vector<1x1xf32> -> vector<1x4xf32>
    %225 = tpu.concatenate %205, %215, %224 in 1 : vector<1x2xf32>, vector<1x2xf32>, vector<1x4xf32> -> vector<1x8xf32>
    %c0_65 = arith.constant 0 : index
    %c0_66 = arith.constant 0 : index
    %c0_67 = arith.constant 0 : index
    %226 = vector.load %arg3[%c0_65, %c0_66, %c0_67] : memref<1x1x8xf32, #tpu.memory_space<vmem>>, vector<1x1x8xf32>
    %227 = vector.shape_cast %226 : vector<1x1x8xf32> to vector<1x8xf32>
    %228 = vector.shape_cast %225 : vector<1x8xf32> to vector<1x1x8xf32>
    tpu.vector_store %arg3[%c0_65, %c0_66, %c0_67], %228 {strides = array<i32>} : memref<1x1x8xf32, #tpu.memory_space<vmem>>, vector<1x1x8xf32>,
    return
  }
  func.func @transform_0(%arg0: i32) -> (i32, i32, i32) {
    %c0_i32 = arith.constant 0 : i32
    %c0_i32_0 = arith.constant 0 : i32
    %c0_i32_1 = arith.constant 0 : i32
    return %arg0, %c0_i32, %c0_i32_0 : i32, i32, i32
  }
  func.func @transform_1(%arg0: i32) -> (i32, i32) {
    %c0_i32 = arith.constant 0 : i32
    %c0_i32_0 = arith.constant 0 : i32
    %c0_i32_1 = arith.constant 0 : i32
    return %c0_i32, %c0_i32_0 : i32, i32
  }
  func.func @transform_2(%arg0: i32) -> (i32, i32, i32) {
    %c0_i32 = arith.constant 0 : i32
    %c0_i32_0 = arith.constant 0 : i32
    %c0_i32_1 = arith.constant 0 : i32
    return %arg0, %c0_i32, %c0_i32_0 : i32, i32, i32
  }
}

</mosaic_0001>

<llo_original>
// kernel: forward.1
$region0: #{forward.1}
  #allocation0 [shape = 'u32[]', space=smem, size = 0x4, offset = 0x4, fixed_abs, tag = 'smem constant byte address 0x4 - core index']
  #allocation1 [shape = 'u32[144,128]{1,0:T(1,128)}', space=vmem, size = 0x12000, scoped, tag = 'internal scratch']
  %s0 = inlined_call_operand.vmem [shape: s32[2,8,4], index: 0, kind: input, shape index: {}]
  %s1 = inlined_call_operand.hbm [shape: f32[488,128], index: 1, kind: input, shape index: {}]
  %s2 = inlined_call_operand.vmem [shape: f32[2,1,8], index: 2, kind: output, shape index: {}]
  %s3 = sld [smem:[#allocation0]]
  $region45: #{forward.1} parent=0
    _
  %s5 = ssub.s32 1, %s3
  %s6 = scalar_select 0, %s5, %s3
  $region1: #{forward.1} parent=0
    #allocation2 [shape = 'u8[249856]{0}', space=vmem, size = 0x3d000, scoped, tag = 'input window, operand 1, single buffered']
    #allocation3 [shape = 's32[2]{0}', space=sflag, size = 0x8, scoped, tag = 'scoped memory for forward.1']
    %7 = vsyncpa [#allocation3], 0
    loop: start=0, step=1, limit=4
    $region2: #{forward.1} parent=1 // loop_pre_header
      _
    $region3: #{forward.1} parent=1 // loop_header
      %s9 = sphi 0, %s13
      %p10 = scmp.ge.s32.totalorder %s9, 4
      %s19 = sphi 0, %s21
      %s22 = sphi 0, %s19
      %s23 = sphi 0, %s22
      %s39 = sphi 0, %s23
      %s43 = sphi 0, %s43
      %s45 = sphi 0, %s43
      %s46 = sphi 0, %s45
      %s60 = sphi 0, %s46
      %s66 = sphi 0, %s68
      %s69 = sphi 0, %s66
      %s70 = sphi 0, %s69
      %s86 = sphi 0, %s70
    $region4: #{forward.1} parent=1 // loop_header_branch
      %12 = sbr.rel (%p10) target = $region8
    $region5: #{forward.1} parent=1 // loop_body
      %s14 = ssub.s32 %s9, 1
      %s15 = ssub.s32 %s9, 2
      %s16 = sadd.s32 %s9, 1
      %s17 = ssub.s32 %s9, %s16
      %p18 = scmp.eq.s32.totalorder %s17, 0
      %s20 = sadd.s32 %s19, 1
      %s21 = scalar_select %p18, %s19, %s20
      %p24 = pneg %p18
      %p25 = scmp.eq.s32.totalorder %s9, 1
      %p26 = por %p24, %p25
      %p27 = scmp.ne.s32.totalorder %s19, %s22
      %p28 = scmp.eq.s32.totalorder %s9, 0
      %p29 = por %p27, %p28
      %p30 = scmp.ne.s32.totalorder %s19, %s22
      %p31 = scmp.eq.s32.totalorder %s14, 1
      %p32 = por %p30, %p31
      %p33 = scmp.ne.s32.totalorder %s22, %s23
      %p34 = scmp.eq.s32.totalorder %s14, 0
      %p35 = por %p33, %p34
      %p36 = scmp.ne.s32.totalorder %s22, %s23
      %p37 = scmp.eq.s32.totalorder %s15, 1
      %p38 = por %p36, %p37
      %p40 = scmp.ne.s32.totalorder %s23, %s39
      %p41 = scmp.eq.s32.totalorder %s15, 0
      %p42 = por %p40, %p41
      %s44 = sadd.s32 %s43, 1
      %p47 = scmp.eq.s32.totalorder %s9, 1
      %p48 = scmp.ne.s32.totalorder %s43, %s45
      %p49 = scmp.eq.s32.totalorder %s9, 0
      %p50 = por %p48, %p49
      %p51 = scmp.ne.s32.totalorder %s43, %s45
      %p52 = scmp.eq.s32.totalorder %s14, 1
      %p53 = por %p51, %p52
      %p54 = scmp.ne.s32.totalorder %s45, %s46
      %p55 = scmp.eq.s32.totalorder %s14, 0
      %p56 = por %p54, %p55
      %p57 = scmp.ne.s32.totalorder %s45, %s46
      %p58 = scmp.eq.s32.totalorder %s15, 1
      %p59 = por %p57, %p58
      %p61 = scmp.ne.s32.totalorder %s46, %s60
      %p62 = scmp.eq.s32.totalorder %s15, 0
      %p63 = por %p61, %p62
      %s64 = ssub.s32 %s9, %s16
      %p65 = scmp.eq.s32.totalorder %s64, 0
      %s67 = sadd.s32 %s66, 1
      %s68 = scalar_select %p65, %s66, %s67
      %p71 = pneg %p65
      %p72 = scmp.eq.s32.totalorder %s9, 1
      %p73 = por %p71, %p72
      %p74 = scmp.ne.s32.totalorder %s66, %s69
      %p75 = scmp.eq.s32.totalorder %s9, 0
      %p76 = por %p74, %p75
      %p77 = scmp.ne.s32.totalorder %s66, %s69
      %p78 = scmp.eq.s32.totalorder %s14, 1
      %p79 = por %p77, %p78
      %p80 = scmp.ne.s32.totalorder %s69, %s70
      %p81 = scmp.eq.s32.totalorder %s14, 0
      %p82 = por %p80, %p81
      %p83 = scmp.ne.s32.totalorder %s69, %s70
      %p84 = scmp.eq.s32.totalorder %s15, 1
      %p85 = por %p83, %p84
      %p87 = scmp.ne.s32.totalorder %s70, %s86
      %p88 = scmp.eq.s32.totalorder %s15, 0
      %p89 = por %p87, %p88
      %p90 = scmp.le.s32.totalorder 1, %s9
      %p91 = scmp.lt.s32.totalorder %s9, 3
      %p92 = pnand %p90, %p91
      %p93 = pneg %p92
      // Predicated region
      $region9: #{forward.1} parent=5 // pred_check
        _
      $region10: #{forward.1} parent=5 // pred_check_branch
        %95 = sbr.rel (%p92) target = $region12
      $region11: #{forward.1} parent=5 // pred_region
        %s96 = ssub.s32 %s9, 1
        // Predicated region
        $region13: #{forward.1} parent=11 // pred_check
          %p97 = pneg %p56
        $region14: #{forward.1} parent=11 // pred_check_branch
          %99 = sbr.rel (%p97) target = $region16
        $region15: #{forward.1} parent=11 // pred_region
          %s101 = ssub.s32 7808, 7808
          %102 = vsyncadd [#allocation3], %s101
          %s103 = sshll.u32 [#allocation2], 4
          %s104 = int_to_ptr.vmem [resolvable:$true] %s103
          %109 = dma.hbm_to_vmem [thread:$0]  %s1, 7808, %s104, [#allocation3], 128, 128, 8
        $region16: #{forward.1} parent=11 // pred_fallthru
          _
      $region12: #{forward.1} parent=5 // pred_fallthru
        _
      %p110 = scmp.lt.s32.totalorder %s9, 2
      // Predicated region
      $region17: #{forward.1} parent=5 // pred_check
        %p111 = pneg %p110
      $region18: #{forward.1} parent=5 // pred_check_branch
        %113 = sbr.rel (%p111) target = $region20
      $region19: #{forward.1} parent=5 // pred_region
        // Predicated region
        $region21: #{forward.1} parent=19 // pred_check
          %p114 = pneg %p29
        $region22: #{forward.1} parent=19 // pred_check_branch
          %116 = sbr.rel (%p114) target = $region24
        $region23: #{forward.1} parent=19 // pred_region
          %p117 = scmp.lt.s32.totalorder %s9, 1
          %s118 = scalar_select %p117, %s9, 1
          %s119 = smul.addr %s118, 8
          %s120 = scalar_lea.vmem %s0, %s119
        $region24: #{forward.1} parent=19 // pred_fallthru
          _
      $region20: #{forward.1} parent=5 // pred_fallthru
        _
      %p121 = scmp.le.s32.totalorder 1, %s9
      %p122 = scmp.lt.s32.totalorder %s9, 3
      %p123 = pnand %p121, %p122
      %p124 = pneg %p123
      // Predicated region
      $region25: #{forward.1} parent=5 // pred_check
        _
      $region26: #{forward.1} parent=5 // pred_check_branch
        %126 = sbr.rel (%p123) target = $region28
      $region27: #{forward.1} parent=5 // pred_region
        %s127 = ssub.s32 %s9, 1
        // Predicated region
        $region29: #{forward.1} parent=27 // pred_check
          %p128 = pneg %p56
        $region30: #{forward.1} parent=27 // pred_check_branch
          %130 = sbr.rel (%p128) target = $region32
        $region31: #{forward.1} parent=27 // pred_region
          %131 = dma.done [#allocation3], 7808
        $region32: #{forward.1} parent=27 // pred_fallthru
          _
        %p132 = scmp.lt.s32.totalorder %s14, 1
        %s133 = scalar_select %p132, %s14, 1
        %s134 = smul.addr %s133, 8
        %s135 = scalar_lea.vmem %s0, %s134
        %p136 = pneg %p35
        %p137 = pneg %p32
        %p138 = pneg %p56
        %p139 = pneg %p53
        %p140 = pneg %p82
        %p141 = pneg %p79
        %p142 = scmp.lt.s32.totalorder %s14, 1
        %s143 = scalar_select %p142, %s14, 1
        %s144 = scalar_lea.vmem %s2, %s143
        %p145 = scmp.lt.s32.totalorder %s14, 1
        %s146 = scalar_select %p145, %s14, 1
        %s147 = smul.addr %s146, 8
        %s148 = scalar_lea.vmem %s0, %s147
        %p149 = scmp.lt.s32.totalorder %s14, 1
        %s150 = scalar_select %p149, %s14, 1
        %s151 = scalar_lea.vmem %s2, %s150
        %v152 = vld [vmem:[%s148] sm:$0xff]
        %v153 = vcvt.s32.f32 %v152
        %v154 = vlaneseq
        %v155 = vand.u32 %v154, 127
        %156 = vset.pattern.permute.xlu0 0
        %157 = vperm.xlu0 %156, %v152
        %v158 = vpop.permute.xlu0 %157
        %vm159 = vcmp.eq.s32.totalorder %v158, %v155
        %v160 = vsel %vm159, 1, 0
        %v161 = vcvt.s32.f32 %v160
        %v162 = vld [vmem:[#allocation2] sm:$0xff]
        %v163 = vld [vmem:[#allocation2 + $0x8] sm:$0xff]
        %v164 = vld [vmem:[#allocation2 + $0x10] sm:$0xff]
        %v165 = vld [vmem:[#allocation2 + $0x18] sm:$0xff]
        %v166 = vld [vmem:[#allocation2 + $0x20] sm:$0xff]
        %v167 = vld [vmem:[#allocation2 + $0x28] sm:$0xff]
        %v168 = vld [vmem:[#allocation2 + $0x30] sm:$0xff]
        %v169 = vld [vmem:[#allocation2 + $0x38] sm:$0xff]
        %v170 = vld [vmem:[#allocation2 + $0x48] sm:$0x1]
        %v171 = vld [vmem:[#allocation2 + $0x49] sm:$0x1]
        %vm172 = vcmp.eq.s32.totalorder %v152, 0
        %v173 = vsel %vm172, 1, 0
        %174 = vset.pattern.permute.xlu0 1
        %175 = vperm.xlu0 %174, %v173
        %v176 = vpop.permute.xlu0 %175
        %vm177 = vcmp.eq.s32.totalorder %v176, 1
        %v178 = vlaneseq
        %v179 = vshrl.u32 %v178, 7
        %v180 = vsub.s32 0, %v179
        %v181 = vrot.slane %v170, %v180
        %v182 = vlaneseq
        %v183 = vshrl.u32 %v182, 7
        %v184 = vsub.s32 0, %v183
        %v185 = vrot.slane %v171, %v184
        %v186 = vsel %vm177, %v181, %v185
        %vm187 = vcmask 523264
        %v189 = vsel %vm187, %v161, 0
        %191 = vmatprep.subr.mxu0 0.0
        %192 = vmatpush1.msra.mxu0 0.0
        %193 = vmatprep.subr.mxu0 0.0
        %194 = vmatpush1.msra.mxu0 0.0
        %195 = vmatprep.subr.mxu0 0.0
        %196 = vmatpush1.msra.mxu0 0.0
        %197 = vmatprep.subr.mxu0 0.0
        %198 = vmatpush1.msra.mxu0 0.0
        %199 = vmatprep.subr.mxu0 0.0
        %200 = vmatpush1.msra.mxu0 0.0
        %201 = vmatprep.subr.mxu0 0.0
        %202 = vmatpush1.msra.mxu0 0.0
        %203 = vmatprep.subr.mxu0 0.0
        %204 = vmatpush1.msra.mxu0 0.0
        %205 = vmatprep.subr.mxu0 0.0
        %206 = vmatpush1.msra.mxu0 0.0
        %207 = vmatprep.subr.mxu0 0.0
        %208 = vmatpush1.msra.mxu0 %v169
        %209 = vmatprep.subr.mxu0 0.0
        %210 = vmatpush1.msra.mxu0 %v168
        %211 = vmatprep.subr.mxu0 0.0
        %212 = vmatpush1.msra.mxu0 %v167
        %213 = vmatprep.subr.mxu0 0.0
        %214 = vmatpush1.msra.mxu0 %v166
        %215 = vmatprep.subr.mxu0 0.0
        %216 = vmatpush1.msra.mxu0 %v165
        %217 = vmatprep.subr.mxu0 0.0
        %218 = vmatpush1.msra.mxu0 %v164
        %219 = vmatprep.subr.mxu0 0.0
        %220 = vmatpush1.msra.mxu0 %v163
        %221 = vmatprep.subr.mxu0 0.0
        %222 = vmatpush1.msra.mxu0 %v162
        %223 = vmatprep.subr.mxu0 0.0
        %224 = vmatpush2.msra.mxu0 0.0
        %225 = vmatprep.subr.mxu0 0.0
        %226 = vmatpush2.msra.mxu0 0.0
        %227 = vmatprep.subr.mxu0 0.0
        %228 = vmatpush2.msra.mxu0 0.0
        %229 = vmatprep.subr.mxu0 0.0
        %230 = vmatpush2.msra.mxu0 0.0
        %231 = vmatprep.subr.mxu0 0.0
        %232 = vmatpush2.msra.mxu0 0.0
        %233 = vmatprep.subr.mxu0 0.0
        %234 = vmatpush2.msra.mxu0 0.0
        %235 = vmatprep.subr.mxu0 0.0
        %236 = vmatpush2.msra.mxu0 0.0
        %237 = vmatprep.subr.mxu0 0.0
        %238 = vmatpush2.msra.mxu0 0.0
        %239 = vmatprep.subr.mxu0 0.0
        %240 = vmatpush2.msra.mxu0 0.0
        %241 = vmatprep.subr.mxu0 0.0
        %242 = vmatpush2.msra.mxu0 0.0
        %243 = vmatprep.subr.mxu0 0.0
        %244 = vmatpush2.msra.mxu0 0.0
        %245 = vmatprep.subr.mxu0 0.0
        %246 = vmatpush2.msra.mxu0 0.0
        %247 = vmatprep.subr.mxu0 0.0
        %248 = vmatpush2.msra.mxu0 0.0
        %249 = vmatprep.subr.mxu0 0.0
        %250 = vmatpush2.msra.mxu0 0.0
        %251 = vmatprep.subr.mxu0 0.0
        %252 = vmatpush2.msra.mxu0 0.0
        %253 = vmatprep.subr.mxu0 0.0
        %254 = vmatpush2.msra.mxu0 0.0
        %255 = vmatprep.mubr.f32.mxu0 0.0
        %256 = vmatmul.mubr.f32.gmra.mxu0 %v189
        %v257 = vpop.f32.mrf.mxu0
        %v258 = vadd.f32 %v186, %v257
        %v259 = vpop.f32.mrf.mxu0
        %260 = vdwg.mxu0
        %v261 = vld [vmem:[#allocation2 + $0x40] sm:$0xff]
        %v262 = vadd.f32 %v258, %v261
        %v263 = vld [vmem:[#allocation2 + $0x50] sm:$0xff]
        %vm264 = vcmask 261120
        %v265 = vsel %vm264, %v262, 0.0
        %266 = vadd.xlane.f32.xlu0 %v265
        %v267 = vpop.xlane.xlu0 %266
        %v268 = vrcp.pop 32.0
        %v269 = vmul.f32 %v267, %v268
        %v270 = vsub.f32 %v262, %v269
        %v271 = vmul.f32 %v270, %v270
        %v272 = vsel %vm264, %v271, 0.0
        %273 = vadd.xlane.f32.xlu0 %v272
        %v274 = vpop.xlane.xlu0 %273
        %v275 = vmul.f32 %v274, %v268
        %v276 = vadd.f32 %v275, 1e-12
        %v277 = vrsqrt.pop %v276
        %v278 = vmul.f32 %v270, %v277
        %v279 = vlaneseq
        %v280 = vshrl.u32 %v279, 7
        %v281 = vsub.s32 0, %v280
        %v282 = vrot.slane %v263, %v281
        %v283 = vmul.f32 %v278, %v282
        %v284 = vlaneseq
        %v285 = vshrl.u32 %v284, 7
        %v286 = vsub.s32 1, %v285
        %v287 = vrot.slane %v263, %v286
        %v288 = vadd.f32 %v283, %v287
        %v289 = vld [vmem:[#allocation2 + $0x58] sm:$0xff]
        %v290 = vld [vmem:[#allocation2 + $0x60] sm:$0xff]
        %v291 = vld [vmem:[#allocation2 + $0x68] sm:$0xff]
        %v292 = vld [vmem:[#allocation2 + $0x70] sm:$0xff]
        %v293 = vld [vmem:[#allocation2 + $0x78] sm:$0x1]
        %v294 = vlaneseq
        %v295 = vshrl.u32 %v294, 7
        %v296 = vsub.s32 0, %v295
        %v297 = vrot.slane %v293, %v296
        %v299 = vsel %vm264, %v288, 0
        %301 = vmatprep.subr.mxu0 0.0
        %302 = vmatpush1.msra.mxu0 0.0
        %303 = vmatprep.subr.mxu0 0.0
        %304 = vmatpush1.msra.mxu0 0.0
        %305 = vmatprep.subr.mxu0 0.0
        %306 = vmatpush1.msra.mxu0 0.0
        %307 = vmatprep.subr.mxu0 0.0
        %308 = vmatpush1.msra.mxu0 0.0
        %309 = vmatprep.subr.mxu0 0.0
        %310 = vmatpush1.msra.mxu0 0.0
        %311 = vmatprep.subr.mxu0 0.0
        %312 = vmatpush1.msra.mxu0 0.0
        %313 = vmatprep.subr.mxu0 0.0
        %314 = vmatpush1.msra.mxu0 0.0
        %315 = vmatprep.subr.mxu0 0.0
        %316 = vmatpush1.msra.mxu0 0.0
        %317 = vmatprep.subr.mxu0 0.0
        %318 = vmatpush1.msra.mxu0 0.0
        %319 = vmatprep.subr.mxu0 0.0
        %320 = vmatpush1.msra.mxu0 0.0
        %321 = vmatprep.subr.mxu0 0.0
        %322 = vmatpush1.msra.mxu0 0.0
        %323 = vmatprep.subr.mxu0 0.0
        %324 = vmatpush1.msra.mxu0 0.0
        %325 = vmatprep.subr.mxu0 0.0
        %326 = vmatpush1.msra.mxu0 %v292
        %327 = vmatprep.subr.mxu0 0.0
        %328 = vmatpush1.msra.mxu0 %v291
        %329 = vmatprep.subr.mxu0 0.0
        %330 = vmatpush1.msra.mxu0 %v290
        %331 = vmatprep.subr.mxu0 0.0
        %332 = vmatpush1.msra.mxu0 %v289
        %333 = vmatprep.subr.mxu0 0.0
        %334 = vmatpush2.msra.mxu0 0.0
        %335 = vmatprep.subr.mxu0 0.0
        %336 = vmatpush2.msra.mxu0 0.0
        %337 = vmatprep.subr.mxu0 0.0
        %338 = vmatpush2.msra.mxu0 0.0
        %339 = vmatprep.subr.mxu0 0.0
        %340 = vmatpush2.msra.mxu0 0.0
        %341 = vmatprep.subr.mxu0 0.0
        %342 = vmatpush2.msra.mxu0 0.0
        %343 = vmatprep.subr.mxu0 0.0
        %344 = vmatpush2.msra.mxu0 0.0
        %345 = vmatprep.subr.mxu0 0.0
        %346 = vmatpush2.msra.mxu0 0.0
        %347 = vmatprep.subr.mxu0 0.0
        %348 = vmatpush2.msra.mxu0 0.0
        %349 = vmatprep.subr.mxu0 0.0
        %350 = vmatpush2.msra.mxu0 0.0
        %351 = vmatprep.subr.mxu0 0.0
        %352 = vmatpush2.msra.mxu0 0.0
        %353 = vmatprep.subr.mxu0 0.0
        %354 = vmatpush2.msra.mxu0 0.0
        %355 = vmatprep.subr.mxu0 0.0
        %356 = vmatpush2.msra.mxu0 0.0
        %357 = vmatprep.subr.mxu0 0.0
        %358 = vmatpush2.msra.mxu0 0.0
        %359 = vmatprep.subr.mxu0 0.0
        %360 = vmatpush2.msra.mxu0 0.0
        %361 = vmatprep.subr.mxu0 0.0
        %362 = vmatpush2.msra.mxu0 0.0
        %363 = vmatprep.subr.mxu0 0.0
        %364 = vmatpush2.msra.mxu0 0.0
        %365 = vmatprep.mubr.f32.mxu0 0.0
        %366 = vmatmul.mubr.f32.gmra.mxu0 %v299
        %v367 = vpop.f32.mrf.mxu0
        %v368 = vadd.f32 %v297, %v367
        %v369 = vpop.f32.mrf.mxu0
        %370 = vdwg.mxu0
        %v371 = vlaneseq
        %v372 = vshrl.u32 %v371, 7
        %vm373 = vcmp.eq.s32.totalorder %v372, %v155
        %v374 = vsel %vm373, 1, 0
        %v375 = vcvt.s32.f32 %v374
        %377 = vset.pattern.permute.xlu0 2
        %378 = vperm.xlu0 %377, %v153
        %v379 = vpop.permute.xlu0 %378
        %v381 = vmul.f32 %v375, %v379
        %vm382 = vcmask 64512
        %v383 = vsel %vm382, %v381, 0.0
        %v384 = vrot.slane %v383, 4
        %v385 = vadd.f32 %v383, %v384
        %v386 = vrot.slane %v385, 2
        %v387 = vadd.f32 %v385, %v386
        %v388 = vrot.slane %v387, 1
        %v389 = vadd.f32 %v387, %v388
        %v390 = vsub.f32 %v389, 1.0
        %v391 = vmul.f32 %v390, 1e+09
        %393 = vrot.lane.b32.xlu0 %v368, 96
        %v394 = vpop.permute.xlu0 %393
        %v395 = vsel %vm264, %v368, 0
        %v397 = vsel %vm264, %v394, 0
        %399 = vmatprep.subr.mxu0 0.0
        %400 = vmatpush1.xpose.msra.mxu0 0.0
        %401 = vmatprep.subr.mxu0 0.0
        %402 = vmatpush1.xpose.msra.mxu0 0.0
        %403 = vmatprep.subr.mxu0 0.0
        %404 = vmatpush1.xpose.msra.mxu0 0.0
        %405 = vmatprep.subr.mxu0 0.0
        %406 = vmatpush1.xpose.msra.mxu0 0.0
        %407 = vmatprep.subr.mxu0 0.0
        %408 = vmatpush1.xpose.msra.mxu0 0.0
        %409 = vmatprep.subr.mxu0 0.0
        %410 = vmatpush1.xpose.msra.mxu0 0.0
        %411 = vmatprep.subr.mxu0 0.0
        %412 = vmatpush1.xpose.msra.mxu0 0.0
        %413 = vmatprep.subr.mxu0 0.0
        %414 = vmatpush1.xpose.msra.mxu0 0.0
        %415 = vmatprep.subr.mxu0 0.0
        %416 = vmatpush1.xpose.msra.mxu0 0.0
        %417 = vmatprep.subr.mxu0 0.0
        %418 = vmatpush1.xpose.msra.mxu0 0.0
        %419 = vmatprep.subr.mxu0 0.0
        %420 = vmatpush1.xpose.msra.mxu0 0.0
        %421 = vmatprep.subr.mxu0 0.0
        %422 = vmatpush1.xpose.msra.mxu0 0.0
        %423 = vmatprep.subr.mxu0 0.0
        %424 = vmatpush1.xpose.msra.mxu0 0.0
        %425 = vmatprep.subr.mxu0 0.0
        %426 = vmatpush1.xpose.msra.mxu0 0.0
        %427 = vmatprep.subr.mxu0 0.0
        %428 = vmatpush1.xpose.msra.mxu0 0.0
        %429 = vmatprep.subr.mxu0 0.0
        %430 = vmatpush1.xpose.msra.mxu0 %v397
        %431 = vmatprep.subr.mxu0 0.0
        %432 = vmatpush2.xpose.msra.mxu0 0.0
        %433 = vmatprep.subr.mxu0 0.0
        %434 = vmatpush2.xpose.msra.mxu0 0.0
        %435 = vmatprep.subr.mxu0 0.0
        %436 = vmatpush2.xpose.msra.mxu0 0.0
        %437 = vmatprep.subr.mxu0 0.0
        %438 = vmatpush2.xpose.msra.mxu0 0.0
        %439 = vmatprep.subr.mxu0 0.0
        %440 = vmatpush2.xpose.msra.mxu0 0.0
        %441 = vmatprep.subr.mxu0 0.0
        %442 = vmatpush2.xpose.msra.mxu0 0.0
        %443 = vmatprep.subr.mxu0 0.0
        %444 = vmatpush2.xpose.msra.mxu0 0.0
        %445 = vmatprep.subr.mxu0 0.0
        %446 = vmatpush2.xpose.msra.mxu0 0.0
        %447 = vmatprep.subr.mxu0 0.0
        %448 = vmatpush2.xpose.msra.mxu0 0.0
        %449 = vmatprep.subr.mxu0 0.0
        %450 = vmatpush2.xpose.msra.mxu0 0.0
        %451 = vmatprep.subr.mxu0 0.0
        %452 = vmatpush2.xpose.msra.mxu0 0.0
        %453 = vmatprep.subr.mxu0 0.0
        %454 = vmatpush2.xpose.msra.mxu0 0.0
        %455 = vmatprep.subr.mxu0 0.0
        %456 = vmatpush2.xpose.msra.mxu0 0.0
        %457 = vmatprep.subr.mxu0 0.0
        %458 = vmatpush2.xpose.msra.mxu0 0.0
        %459 = vmatprep.subr.mxu0 0.0
        %460 = vmatpush2.xpose.msra.mxu0 0.0
        %461 = vmatprep.subr.mxu0 0.0
        %462 = vmatpush2.xpose.msra.mxu0 0.0
        %463 = vmatprep.mubr.f32.mxu0 0.0
        %464 = vmatmul.mubr.f32.gmra.mxu0 %v395
        %v465 = vpop.f32.mrf.mxu0
        %v466 = vadd.f32 0.0, %v465
        %v467 = vpop.f32.mrf.mxu0
        %468 = vdwg.mxu0
        %v469 = vmul.f32 %v466, 0.17677669
        %v470 = vadd.f32 %v469, %v391
        %v471 = vsel %vm382, %v470, -inf
        %472 = vmax.xlane.f32.xlu0 %v471
        %v473 = vpop.xlane.xlu0 %472
        %v474 = vsub.f32 %v470, %v473
        %v475 = vmul.f32 %v474, 1.442695
        %v476 = vpow.pop %v475
        %v477 = vsel %vm382, %v476, 0.0
        %478 = vadd.xlane.f32.xlu0 %v477
        %v479 = vpop.xlane.xlu0 %478
        %v480 = vrcp.pop %v479
        %v481 = vmul.f32 %v476, %v480
        %482 = vrot.lane.b32.xlu0 %v368, 64
        %v483 = vpop.permute.xlu0 %482
        %v486 = vsel %vm382, %v481, 0
        %488 = vmatprep.subr.mxu0 0.0
        %489 = vmatpush1.msra.mxu0 0.0
        %490 = vmatprep.subr.mxu0 0.0
        %491 = vmatpush1.msra.mxu0 0.0
        %492 = vmatprep.subr.mxu0 0.0
        %493 = vmatpush1.msra.mxu0 0.0
        %494 = vmatprep.subr.mxu0 0.0
        %495 = vmatpush1.msra.mxu0 0.0
        %496 = vmatprep.subr.mxu0 0.0
        %497 = vmatpush1.msra.mxu0 0.0
        %498 = vmatprep.subr.mxu0 0.0
        %499 = vmatpush1.msra.mxu0 0.0
        %500 = vmatprep.subr.mxu0 0.0
        %501 = vmatpush1.msra.mxu0 0.0
        %502 = vmatprep.subr.mxu0 0.0
        %503 = vmatpush1.msra.mxu0 0.0
        %504 = vmatprep.subr.mxu0 0.0
        %505 = vmatpush1.msra.mxu0 0.0
        %506 = vmatprep.subr.mxu0 0.0
        %507 = vmatpush1.msra.mxu0 0.0
        %508 = vmatprep.subr.mxu0 0.0
        %509 = vmatpush1.msra.mxu0 0.0
        %510 = vmatprep.subr.mxu0 0.0
        %511 = vmatpush1.msra.mxu0 0.0
        %512 = vmatprep.subr.mxu0 0.0
        %513 = vmatpush1.msra.mxu0 0.0
        %514 = vmatprep.subr.mxu0 0.0
        %515 = vmatpush1.msra.mxu0 0.0
        %516 = vmatprep.subr.mxu0 0.0
        %517 = vmatpush1.msra.mxu0 0.0
        %518 = vmatprep.subr.mxu0 0.0
        %519 = vmatpush1.msra.mxu0 %v483
        %520 = vmatprep.subr.mxu0 0.0
        %521 = vmatpush2.msra.mxu0 0.0
        %522 = vmatprep.subr.mxu0 0.0
        %523 = vmatpush2.msra.mxu0 0.0
        %524 = vmatprep.subr.mxu0 0.0
        %525 = vmatpush2.msra.mxu0 0.0
        %526 = vmatprep.subr.mxu0 0.0
        %527 = vmatpush2.msra.mxu0 0.0
        %528 = vmatprep.subr.mxu0 0.0
        %529 = vmatpush2.msra.mxu0 0.0
        %530 = vmatprep.subr.mxu0 0.0
        %531 = vmatpush2.msra.mxu0 0.0
        %532 = vmatprep.subr.mxu0 0.0
        %533 = vmatpush2.msra.mxu0 0.0
        %534 = vmatprep.subr.mxu0 0.0
        %535 = vmatpush2.msra.mxu0 0.0
        %536 = vmatprep.subr.mxu0 0.0
        %537 = vmatpush2.msra.mxu0 0.0
        %538 = vmatprep.subr.mxu0 0.0
        %539 = vmatpush2.msra.mxu0 0.0
        %540 = vmatprep.subr.mxu0 0.0
        %541 = vmatpush2.msra.mxu0 0.0
        %542 = vmatprep.subr.mxu0 0.0
        %543 = vmatpush2.msra.mxu0 0.0
        %544 = vmatprep.subr.mxu0 0.0
        %545 = vmatpush2.msra.mxu0 0.0
        %546 = vmatprep.subr.mxu0 0.0
        %547 = vmatpush2.msra.mxu0 0.0
        %548 = vmatprep.subr.mxu0 0.0
        %549 = vmatpush2.msra.mxu0 0.0
        %550 = vmatprep.subr.mxu0 0.0
        %551 = vmatpush2.msra.mxu0 0.0
        %552 = vmatprep.mubr.f32.mxu0 0.0
        %553 = vmatmul.mubr.f32.gmra.mxu0 %v486
        %v554 = vpop.f32.mrf.mxu0
        %v555 = vadd.f32 0.0, %v554
        %v556 = vpop.f32.mrf.mxu0
        %557 = vdwg.mxu0
        %v558 = vld [vmem:[#allocation2 + $0x80] sm:$0xff]
        %v559 = vld [vmem:[#allocation2 + $0x88] sm:$0xff]
        %v560 = vld [vmem:[#allocation2 + $0x90] sm:$0xff]
        %v561 = vld [vmem:[#allocation2 + $0x98] sm:$0xff]
        %v562 = vlaneseq
        %v563 = vshrl.u32 %v562, 7
        %v564 = vsub.s32 6, %v563
        %v565 = vrot.slane %v263, %v564
        %v567 = vsel %vm264, %v555, 0
        %569 = vmatprep.subr.mxu0 0.0
        %570 = vmatpush1.msra.mxu0 0.0
        %571 = vmatprep.subr.mxu0 0.0
        %572 = vmatpush1.msra.mxu0 0.0
        %573 = vmatprep.subr.mxu0 0.0
        %574 = vmatpush1.msra.mxu0 0.0
        %575 = vmatprep.subr.mxu0 0.0
        %576 = vmatpush1.msra.mxu0 0.0
        %577 = vmatprep.subr.mxu0 0.0
        %578 = vmatpush1.msra.mxu0 0.0
        %579 = vmatprep.subr.mxu0 0.0
        %580 = vmatpush1.msra.mxu0 0.0
        %581 = vmatprep.subr.mxu0 0.0
        %582 = vmatpush1.msra.mxu0 0.0
        %583 = vmatprep.subr.mxu0 0.0
        %584 = vmatpush1.msra.mxu0 0.0
        %585 = vmatprep.subr.mxu0 0.0
        %586 = vmatpush1.msra.mxu0 0.0
        %587 = vmatprep.subr.mxu0 0.0
        %588 = vmatpush1.msra.mxu0 0.0
        %589 = vmatprep.subr.mxu0 0.0
        %590 = vmatpush1.msra.mxu0 0.0
        %591 = vmatprep.subr.mxu0 0.0
        %592 = vmatpush1.msra.mxu0 0.0
        %593 = vmatprep.subr.mxu0 0.0
        %594 = vmatpush1.msra.mxu0 %v561
        %595 = vmatprep.subr.mxu0 0.0
        %596 = vmatpush1.msra.mxu0 %v560
        %597 = vmatprep.subr.mxu0 0.0
        %598 = vmatpush1.msra.mxu0 %v559
        %599 = vmatprep.subr.mxu0 0.0
        %600 = vmatpush1.msra.mxu0 %v558
        %601 = vmatprep.subr.mxu0 0.0
        %602 = vmatpush2.msra.mxu0 0.0
        %603 = vmatprep.subr.mxu0 0.0
        %604 = vmatpush2.msra.mxu0 0.0
        %605 = vmatprep.subr.mxu0 0.0
        %606 = vmatpush2.msra.mxu0 0.0
        %607 = vmatprep.subr.mxu0 0.0
        %608 = vmatpush2.msra.mxu0 0.0
        %609 = vmatprep.subr.mxu0 0.0
        %610 = vmatpush2.msra.mxu0 0.0
        %611 = vmatprep.subr.mxu0 0.0
        %612 = vmatpush2.msra.mxu0 0.0
        %613 = vmatprep.subr.mxu0 0.0
        %614 = vmatpush2.msra.mxu0 0.0
        %615 = vmatprep.subr.mxu0 0.0
        %616 = vmatpush2.msra.mxu0 0.0
        %617 = vmatprep.subr.mxu0 0.0
        %618 = vmatpush2.msra.mxu0 0.0
        %619 = vmatprep.subr.mxu0 0.0
        %620 = vmatpush2.msra.mxu0 0.0
        %621 = vmatprep.subr.mxu0 0.0
        %622 = vmatpush2.msra.mxu0 0.0
        %623 = vmatprep.subr.mxu0 0.0
        %624 = vmatpush2.msra.mxu0 0.0
        %625 = vmatprep.subr.mxu0 0.0
        %626 = vmatpush2.msra.mxu0 0.0
        %627 = vmatprep.subr.mxu0 0.0
        %628 = vmatpush2.msra.mxu0 0.0
        %629 = vmatprep.subr.mxu0 0.0
        %630 = vmatpush2.msra.mxu0 0.0
        %631 = vmatprep.subr.mxu0 0.0
        %632 = vmatpush2.msra.mxu0 0.0
        %633 = vmatprep.mubr.f32.mxu0 0.0
        %634 = vmatmul.mubr.f32.gmra.mxu0 %v567
        %v635 = vpop.f32.mrf.mxu0
        %v636 = vadd.f32 %v565, %v635
        %v637 = vpop.f32.mrf.mxu0
        %638 = vdwg.mxu0
        %v639 = vadd.f32 %v288, %v636
        %v640 = vsel %vm264, %v639, 0.0
        %641 = vadd.xlane.f32.xlu0 %v640
        %v642 = vpop.xlane.xlu0 %641
        %v643 = vmul.f32 %v642, %v268
        %v644 = vsub.f32 %v639, %v643
        %v645 = vmul.f32 %v644, %v644
        %v646 = vsel %vm264, %v645, 0.0
        %647 = vadd.xlane.f32.xlu0 %v646
        %v648 = vpop.xlane.xlu0 %647
        %v649 = vmul.f32 %v648, %v268
        %v650 = vadd.f32 %v649, 1e-12
        %v651 = vrsqrt.pop %v650
        %v652 = vmul.f32 %v644, %v651
        %v653 = vlaneseq
        %v654 = vshrl.u32 %v653, 7
        %v655 = vsub.s32 2, %v654
        %v656 = vrot.slane %v263, %v655
        %v657 = vmul.f32 %v652, %v656
        %v658 = vlaneseq
        %v659 = vshrl.u32 %v658, 7
        %v660 = vsub.s32 3, %v659
        %v661 = vrot.slane %v263, %v660
        %v662 = vadd.f32 %v657, %v661
        %v663 = vld [vmem:[#allocation2 + $0xa0] sm:$0xff]
        %v664 = vld [vmem:[#allocation2 + $0xa8] sm:$0xff]
        %v665 = vld [vmem:[#allocation2 + $0xb0] sm:$0xff]
        %v666 = vld [vmem:[#allocation2 + $0xb8] sm:$0xff]
        %v667 = vld [vmem:[#allocation2 + $0xc0] sm:$0x1]
        %v668 = vlaneseq
        %v669 = vshrl.u32 %v668, 7
        %v670 = vsub.s32 0, %v669
        %v671 = vrot.slane %v667, %v670
        %v673 = vsel %vm264, %v662, 0
        %675 = vmatprep.subr.mxu0 0.0
        %676 = vmatpush1.msra.mxu0 0.0
        %677 = vmatprep.subr.mxu0 0.0
        %678 = vmatpush1.msra.mxu0 0.0
        %679 = vmatprep.subr.mxu0 0.0
        %680 = vmatpush1.msra.mxu0 0.0
        %681 = vmatprep.subr.mxu0 0.0
        %682 = vmatpush1.msra.mxu0 0.0
        %683 = vmatprep.subr.mxu0 0.0
        %684 = vmatpush1.msra.mxu0 0.0
        %685 = vmatprep.subr.mxu0 0.0
        %686 = vmatpush1.msra.mxu0 0.0
        %687 = vmatprep.subr.mxu0 0.0
        %688 = vmatpush1.msra.mxu0 0.0
        %689 = vmatprep.subr.mxu0 0.0
        %690 = vmatpush1.msra.mxu0 0.0
        %691 = vmatprep.subr.mxu0 0.0
        %692 = vmatpush1.msra.mxu0 0.0
        %693 = vmatprep.subr.mxu0 0.0
        %694 = vmatpush1.msra.mxu0 0.0
        %695 = vmatprep.subr.mxu0 0.0
        %696 = vmatpush1.msra.mxu0 0.0
        %697 = vmatprep.subr.mxu0 0.0
        %698 = vmatpush1.msra.mxu0 0.0
        %699 = vmatprep.subr.mxu0 0.0
        %700 = vmatpush1.msra.mxu0 %v666
        %701 = vmatprep.subr.mxu0 0.0
        %702 = vmatpush1.msra.mxu0 %v665
        %703 = vmatprep.subr.mxu0 0.0
        %704 = vmatpush1.msra.mxu0 %v664
        %705 = vmatprep.subr.mxu0 0.0
        %706 = vmatpush1.msra.mxu0 %v663
        %707 = vmatprep.subr.mxu0 0.0
        %708 = vmatpush2.msra.mxu0 0.0
        %709 = vmatprep.subr.mxu0 0.0
        %710 = vmatpush2.msra.mxu0 0.0
        %711 = vmatprep.subr.mxu0 0.0
        %712 = vmatpush2.msra.mxu0 0.0
        %713 = vmatprep.subr.mxu0 0.0
        %714 = vmatpush2.msra.mxu0 0.0
        %715 = vmatprep.subr.mxu0 0.0
        %716 = vmatpush2.msra.mxu0 0.0
        %717 = vmatprep.subr.mxu0 0.0
        %718 = vmatpush2.msra.mxu0 0.0
        %719 = vmatprep.subr.mxu0 0.0
        %720 = vmatpush2.msra.mxu0 0.0
        %721 = vmatprep.subr.mxu0 0.0
        %722 = vmatpush2.msra.mxu0 0.0
        %723 = vmatprep.subr.mxu0 0.0
        %724 = vmatpush2.msra.mxu0 0.0
        %725 = vmatprep.subr.mxu0 0.0
        %726 = vmatpush2.msra.mxu0 0.0
        %727 = vmatprep.subr.mxu0 0.0
        %728 = vmatpush2.msra.mxu0 0.0
        %729 = vmatprep.subr.mxu0 0.0
        %730 = vmatpush2.msra.mxu0 0.0
        %731 = vmatprep.subr.mxu0 0.0
        %732 = vmatpush2.msra.mxu0 0.0
        %733 = vmatprep.subr.mxu0 0.0
        %734 = vmatpush2.msra.mxu0 0.0
        %735 = vmatprep.subr.mxu0 0.0
        %736 = vmatpush2.msra.mxu0 0.0
        %737 = vmatprep.subr.mxu0 0.0
        %738 = vmatpush2.msra.mxu0 0.0
        %739 = vmatprep.mubr.f32.mxu0 0.0
        %740 = vmatmul.mubr.f32.gmra.mxu0 %v673
        %v741 = vpop.f32.mrf.mxu0
        %v742 = vadd.f32 %v671, %v741
        %v743 = vpop.f32.mrf.mxu0
        %744 = vdwg.mxu0
        %v745 = vmul.f32 %v742, %v742
        %v746 = vmul.f32 %v742, %v745
        %v747 = vmul.f32 %v746, 0.044715
        %v748 = vadd.f32 %v742, %v747
        %v749 = vmul.f32 %v748, 0.7978846
        %v750 = vtanh.pop %v749
        %v751 = vadd.f32 %v750, 1.0
        %v752 = vmul.f32 %v751, 0.5
        %v753 = vmul.f32 %v742, %v752
        %v754 = vld [vmem:[#allocation2 + $0xc8] sm:$0xff]
        %v755 = vld [vmem:[#allocation2 + $0xd0] sm:$0xff]
        %v756 = vld [vmem:[#allocation2 + $0xd8] sm:$0xff]
        %v757 = vld [vmem:[#allocation2 + $0xe0] sm:$0xff]
        %v758 = vld [vmem:[#allocation2 + $0xe8] sm:$0xff]
        %v759 = vld [vmem:[#allocation2 + $0xf0] sm:$0xff]
        %v760 = vld [vmem:[#allocation2 + $0xf8] sm:$0xff]
        %v761 = vld [vmem:[#allocation2 + $0x100] sm:$0xff]
        %v762 = vld [vmem:[#allocation2 + $0x108] sm:$0xff]
        %v763 = vld [vmem:[#allocation2 + $0x110] sm:$0xff]
        %v764 = vld [vmem:[#allocation2 + $0x118] sm:$0xff]
        %v765 = vld [vmem:[#allocation2 + $0x120] sm:$0xff]
        %v766 = vld [vmem:[#allocation2 + $0x128] sm:$0xff]
        %v767 = vld [vmem:[#allocation2 + $0x130] sm:$0xff]
        %v768 = vld [vmem:[#allocation2 + $0x138] sm:$0xff]
        %v769 = vld [vmem:[#allocation2 + $0x140] sm:$0xff]
        %v770 = vlaneseq
        %v771 = vshrl.u32 %v770, 7
        %v772 = vsub.s32 7, %v771
        %v773 = vrot.slane %v263, %v772
        %774 = vmatprep.subr.mxu0 0.0
        %775 = vmatpush1.msra.mxu0 %v769
        %776 = vmatprep.subr.mxu0 0.0
        %777 = vmatpush1.msra.mxu0 %v768
        %778 = vmatprep.subr.mxu0 0.0
        %779 = vmatpush1.msra.mxu0 %v767
        %780 = vmatprep.subr.mxu0 0.0
        %781 = vmatpush1.msra.mxu0 %v766
        %782 = vmatprep.subr.mxu0 0.0
        %783 = vmatpush1.msra.mxu0 %v765
        %784 = vmatprep.subr.mxu0 0.0
        %785 = vmatpush1.msra.mxu0 %v764
        %786 = vmatprep.subr.mxu0 0.0
        %787 = vmatpush1.msra.mxu0 %v763
        %788 = vmatprep.subr.mxu0 0.0
        %789 = vmatpush1.msra.mxu0 %v762
        %790 = vmatprep.subr.mxu0 0.0
        %791 = vmatpush1.msra.mxu0 %v761
        %792 = vmatprep.subr.mxu0 0.0
        %793 = vmatpush1.msra.mxu0 %v760
        %794 = vmatprep.subr.mxu0 0.0
        %795 = vmatpush1.msra.mxu0 %v759
        %796 = vmatprep.subr.mxu0 0.0
        %797 = vmatpush1.msra.mxu0 %v758
        %798 = vmatprep.subr.mxu0 0.0
        %799 = vmatpush1.msra.mxu0 %v757
        %800 = vmatprep.subr.mxu0 0.0
        %801 = vmatpush1.msra.mxu0 %v756
        %802 = vmatprep.subr.mxu0 0.0
        %803 = vmatpush1.msra.mxu0 %v755
        %804 = vmatprep.subr.mxu0 0.0
        %805 = vmatpush1.msra.mxu0 %v754
        %806 = vmatprep.subr.mxu0 0.0
        %807 = vmatpush2.msra.mxu0 0.0
        %808 = vmatprep.subr.mxu0 0.0
        %809 = vmatpush2.msra.mxu0 0.0
        %810 = vmatprep.subr.mxu0 0.0
        %811 = vmatpush2.msra.mxu0 0.0
        %812 = vmatprep.subr.mxu0 0.0
        %813 = vmatpush2.msra.mxu0 0.0
        %814 = vmatprep.subr.mxu0 0.0
        %815 = vmatpush2.msra.mxu0 0.0
        %816 = vmatprep.subr.mxu0 0.0
        %817 = vmatpush2.msra.mxu0 0.0
        %818 = vmatprep.subr.mxu0 0.0
        %819 = vmatpush2.msra.mxu0 0.0
        %820 = vmatprep.subr.mxu0 0.0
        %821 = vmatpush2.msra.mxu0 0.0
        %822 = vmatprep.subr.mxu0 0.0
        %823 = vmatpush2.msra.mxu0 0.0
        %824 = vmatprep.subr.mxu0 0.0
        %825 = vmatpush2.msra.mxu0 0.0
        %826 = vmatprep.subr.mxu0 0.0
        %827 = vmatpush2.msra.mxu0 0.0
        %828 = vmatprep.subr.mxu0 0.0
        %829 = vmatpush2.msra.mxu0 0.0
        %830 = vmatprep.subr.mxu0 0.0
        %831 = vmatpush2.msra.mxu0 0.0
        %832 = vmatprep.subr.mxu0 0.0
        %833 = vmatpush2.msra.mxu0 0.0
        %834 = vmatprep.subr.mxu0 0.0
        %835 = vmatpush2.msra.mxu0 0.0
        %836 = vmatprep.subr.mxu0 0.0
        %837 = vmatpush2.msra.mxu0 0.0
        %838 = vmatprep.mubr.f32.mxu0 0.0
        %839 = vmatmul.mubr.f32.gmra.mxu0 %v753
        %v840 = vpop.f32.mrf.mxu0
        %v841 = vadd.f32 %v773, %v840
        %v842 = vpop.f32.mrf.mxu0
        %843 = vdwg.mxu0
        %v844 = vadd.f32 %v662, %v841
        %v845 = vsel %vm264, %v844, 0.0
        %846 = vadd.xlane.f32.xlu0 %v845
        %v847 = vpop.xlane.xlu0 %846
        %v848 = vmul.f32 %v847, %v268
        %v849 = vsub.f32 %v844, %v848
        %v850 = vmul.f32 %v849, %v849
        %v851 = vsel %vm264, %v850, 0.0
        %852 = vadd.xlane.f32.xlu0 %v851
        %v853 = vpop.xlane.xlu0 %852
        %v854 = vmul.f32 %v853, %v268
        %v855 = vadd.f32 %v854, 1e-12
        %v856 = vrsqrt.pop %v855
        %v857 = vmul.f32 %v849, %v856
        %v858 = vlaneseq
        %v859 = vshrl.u32 %v858, 7
        %v860 = vsub.s32 4, %v859
        %v861 = vrot.slane %v263, %v860
        %v862 = vmul.f32 %v857, %v861
        %v863 = vlaneseq
        %v864 = vshrl.u32 %v863, 7
        %v865 = vsub.s32 5, %v864
        %v866 = vrot.slane %v263, %v865
        %v867 = vadd.f32 %v862, %v866
        %v868 = vld [vmem:[#allocation2 + $0x148] sm:$0xff]
        %v869 = vld [vmem:[#allocation2 + $0x150] sm:$0xff]
        %v870 = vld [vmem:[#allocation2 + $0x158] sm:$0xff]
        %v871 = vld [vmem:[#allocation2 + $0x160] sm:$0xff]
        %v872 = vld [vmem:[#allocation2 + $0x1c8] sm:$0x1]
        %v873 = vlaneseq
        %v874 = vshrl.u32 %v873, 7
        %v875 = vsub.s32 0, %v874
        %v876 = vrot.slane %v872, %v875
        %v878 = vsel %vm264, %v867, 0
        %880 = vmatprep.subr.mxu0 0.0
        %881 = vmatpush1.msra.mxu0 0.0
        %882 = vmatprep.subr.mxu0 0.0
        %883 = vmatpush1.msra.mxu0 0.0
        %884 = vmatprep.subr.mxu0 0.0
        %885 = vmatpush1.msra.mxu0 0.0
        %886 = vmatprep.subr.mxu0 0.0
        %887 = vmatpush1.msra.mxu0 0.0
        %888 = vmatprep.subr.mxu0 0.0
        %889 = vmatpush1.msra.mxu0 0.0
        %890 = vmatprep.subr.mxu0 0.0
        %891 = vmatpush1.msra.mxu0 0.0
        %892 = vmatprep.subr.mxu0 0.0
        %893 = vmatpush1.msra.mxu0 0.0
        %894 = vmatprep.subr.mxu0 0.0
        %895 = vmatpush1.msra.mxu0 0.0
        %896 = vmatprep.subr.mxu0 0.0
        %897 = vmatpush1.msra.mxu0 0.0
        %898 = vmatprep.subr.mxu0 0.0
        %899 = vmatpush1.msra.mxu0 0.0
        %900 = vmatprep.subr.mxu0 0.0
        %901 = vmatpush1.msra.mxu0 0.0
        %902 = vmatprep.subr.mxu0 0.0
        %903 = vmatpush1.msra.mxu0 0.0
        %904 = vmatprep.subr.mxu0 0.0
        %905 = vmatpush1.msra.mxu0 %v871
        %906 = vmatprep.subr.mxu0 0.0
        %907 = vmatpush1.msra.mxu0 %v870
        %908 = vmatprep.subr.mxu0 0.0
        %909 = vmatpush1.msra.mxu0 %v869
        %910 = vmatprep.subr.mxu0 0.0
        %911 = vmatpush1.msra.mxu0 %v868
        %912 = vmatprep.subr.mxu0 0.0
        %913 = vmatpush2.msra.mxu0 0.0
        %914 = vmatprep.subr.mxu0 0.0
        %915 = vmatpush2.msra.mxu0 0.0
        %916 = vmatprep.subr.mxu0 0.0
        %917 = vmatpush2.msra.mxu0 0.0
        %918 = vmatprep.subr.mxu0 0.0
        %919 = vmatpush2.msra.mxu0 0.0
        %920 = vmatprep.subr.mxu0 0.0
        %921 = vmatpush2.msra.mxu0 0.0
        %922 = vmatprep.subr.mxu0 0.0
        %923 = vmatpush2.msra.mxu0 0.0
        %924 = vmatprep.subr.mxu0 0.0
        %925 = vmatpush2.msra.mxu0 0.0
        %926 = vmatprep.subr.mxu0 0.0
        %927 = vmatpush2.msra.mxu0 0.0
        %928 = vmatprep.subr.mxu0 0.0
        %929 = vmatpush2.msra.mxu0 0.0
        %930 = vmatprep.subr.mxu0 0.0
        %931 = vmatpush2.msra.mxu0 0.0
        %932 = vmatprep.subr.mxu0 0.0
        %933 = vmatpush2.msra.mxu0 0.0
        %934 = vmatprep.subr.mxu0 0.0
        %935 = vmatpush2.msra.mxu0 0.0
        %936 = vmatprep.subr.mxu0 0.0
        %937 = vmatpush2.msra.mxu0 0.0
        %938 = vmatprep.subr.mxu0 0.0
        %939 = vmatpush2.msra.mxu0 0.0
        %940 = vmatprep.subr.mxu0 0.0
        %941 = vmatpush2.msra.mxu0 0.0
        %942 = vmatprep.subr.mxu0 0.0
        %943 = vmatpush2.msra.mxu0 0.0
        %944 = vmatprep.mubr.f32.mxu0 0.0
        %945 = vmatmul.mubr.f32.gmra.mxu0 %v878
        %v946 = vpop.f32.mrf.mxu0
        %v947 = vadd.f32 %v876, %v946
        %v948 = vpop.f32.mrf.mxu0
        %949 = vdwg.mxu0
        %v950 = vld [vmem:[#allocation2 + $0x168] sm:$0xff]
        %v951 = vld [vmem:[#allocation2 + $0x170] sm:$0xff]
        %v952 = vld [vmem:[#allocation2 + $0x178] sm:$0xff]
        %v953 = vld [vmem:[#allocation2 + $0x180] sm:$0xff]
        %vm955 = vcmask 1046528
        %v956 = vrot.slane %v867, 1
        %v957 = vrot.slane 0.0, 1
        %v958 = vsel %vm955, %v956, %v957
        %v959 = vsel %vm264, %v958, 0
        %961 = vmatprep.subr.mxu0 0.0
        %962 = vmatpush1.msra.mxu0 0.0
        %963 = vmatprep.subr.mxu0 0.0
        %964 = vmatpush1.msra.mxu0 0.0
        %965 = vmatprep.subr.mxu0 0.0
        %966 = vmatpush1.msra.mxu0 0.0
        %967 = vmatprep.subr.mxu0 0.0
        %968 = vmatpush1.msra.mxu0 0.0
        %969 = vmatprep.subr.mxu0 0.0
        %970 = vmatpush1.msra.mxu0 0.0
        %971 = vmatprep.subr.mxu0 0.0
        %972 = vmatpush1.msra.mxu0 0.0
        %973 = vmatprep.subr.mxu0 0.0
        %974 = vmatpush1.msra.mxu0 0.0
        %975 = vmatprep.subr.mxu0 0.0
        %976 = vmatpush1.msra.mxu0 0.0
        %977 = vmatprep.subr.mxu0 0.0
        %978 = vmatpush1.msra.mxu0 0.0
        %979 = vmatprep.subr.mxu0 0.0
        %980 = vmatpush1.msra.mxu0 0.0
        %981 = vmatprep.subr.mxu0 0.0
        %982 = vmatpush1.msra.mxu0 0.0
        %983 = vmatprep.subr.mxu0 0.0
        %984 = vmatpush1.msra.mxu0 0.0
        %985 = vmatprep.subr.mxu0 0.0
        %986 = vmatpush1.msra.mxu0 %v953
        %987 = vmatprep.subr.mxu0 0.0
        %988 = vmatpush1.msra.mxu0 %v952
        %989 = vmatprep.subr.mxu0 0.0
        %990 = vmatpush1.msra.mxu0 %v951
        %991 = vmatprep.subr.mxu0 0.0
        %992 = vmatpush1.msra.mxu0 %v950
        %993 = vmatprep.subr.mxu0 0.0
        %994 = vmatpush2.msra.mxu0 0.0
        %995 = vmatprep.subr.mxu0 0.0
        %996 = vmatpush2.msra.mxu0 0.0
        %997 = vmatprep.subr.mxu0 0.0
        %998 = vmatpush2.msra.mxu0 0.0
        %999 = vmatprep.subr.mxu0 0.0
        %1000 = vmatpush2.msra.mxu0 0.0
        %1001 = vmatprep.subr.mxu0 0.0
        %1002 = vmatpush2.msra.mxu0 0.0
        %1003 = vmatprep.subr.mxu0 0.0
        %1004 = vmatpush2.msra.mxu0 0.0
        %1005 = vmatprep.subr.mxu0 0.0
        %1006 = vmatpush2.msra.mxu0 0.0
        %1007 = vmatprep.subr.mxu0 0.0
        %1008 = vmatpush2.msra.mxu0 0.0
        %1009 = vmatprep.subr.mxu0 0.0
        %1010 = vmatpush2.msra.mxu0 0.0
        %1011 = vmatprep.subr.mxu0 0.0
        %1012 = vmatpush2.msra.mxu0 0.0
        %1013 = vmatprep.subr.mxu0 0.0
        %1014 = vmatpush2.msra.mxu0 0.0
        %1015 = vmatprep.subr.mxu0 0.0
        %1016 = vmatpush2.msra.mxu0 0.0
        %1017 = vmatprep.subr.mxu0 0.0
        %1018 = vmatpush2.msra.mxu0 0.0
        %1019 = vmatprep.subr.mxu0 0.0
        %1020 = vmatpush2.msra.mxu0 0.0
        %1021 = vmatprep.subr.mxu0 0.0
        %1022 = vmatpush2.msra.mxu0 0.0
        %1023 = vmatprep.subr.mxu0 0.0
        %1024 = vmatpush2.msra.mxu0 0.0
        %1025 = vmatprep.mubr.f32.mxu0 0.0
        %1026 = vmatmul.mubr.f32.gmra.mxu0 %v959
        %v1027 = vpop.f32.mrf.mxu0
        %v1028 = vadd.f32 0.0, %v1027
        %v1029 = vpop.f32.mrf.mxu0
        %1030 = vdwg.mxu0
        %v1031 = vadd.f32 %v947, %v1028
        %v1032 = vld [vmem:[#allocation2 + $0x188] sm:$0xff]
        %v1033 = vld [vmem:[#allocation2 + $0x190] sm:$0xff]
        %v1034 = vld [vmem:[#allocation2 + $0x198] sm:$0xff]
        %v1035 = vld [vmem:[#allocation2 + $0x1a0] sm:$0xff]
        %vm1036 = vcmask 1045504
        %v1037 = vrot.slane %v867, 2
        %v1038 = vrot.slane 0.0, 2
        %v1039 = vsel %vm1036, %v1037, %v1038
        %v1040 = vsel %vm264, %v1039, 0
        %1042 = vmatprep.subr.mxu0 0.0
        %1043 = vmatpush1.msra.mxu0 0.0
        %1044 = vmatprep.subr.mxu0 0.0
        %1045 = vmatpush1.msra.mxu0 0.0
        %1046 = vmatprep.subr.mxu0 0.0
        %1047 = vmatpush1.msra.mxu0 0.0
        %1048 = vmatprep.subr.mxu0 0.0
        %1049 = vmatpush1.msra.mxu0 0.0
        %1050 = vmatprep.subr.mxu0 0.0
        %1051 = vmatpush1.msra.mxu0 0.0
        %1052 = vmatprep.subr.mxu0 0.0
        %1053 = vmatpush1.msra.mxu0 0.0
        %1054 = vmatprep.subr.mxu0 0.0
        %1055 = vmatpush1.msra.mxu0 0.0
        %1056 = vmatprep.subr.mxu0 0.0
        %1057 = vmatpush1.msra.mxu0 0.0
        %1058 = vmatprep.subr.mxu0 0.0
        %1059 = vmatpush1.msra.mxu0 0.0
        %1060 = vmatprep.subr.mxu0 0.0
        %1061 = vmatpush1.msra.mxu0 0.0
        %1062 = vmatprep.subr.mxu0 0.0
        %1063 = vmatpush1.msra.mxu0 0.0
        %1064 = vmatprep.subr.mxu0 0.0
        %1065 = vmatpush1.msra.mxu0 0.0
        %1066 = vmatprep.subr.mxu0 0.0
        %1067 = vmatpush1.msra.mxu0 %v1035
        %1068 = vmatprep.subr.mxu0 0.0
        %1069 = vmatpush1.msra.mxu0 %v1034
        %1070 = vmatprep.subr.mxu0 0.0
        %1071 = vmatpush1.msra.mxu0 %v1033
        %1072 = vmatprep.subr.mxu0 0.0
        %1073 = vmatpush1.msra.mxu0 %v1032
        %1074 = vmatprep.subr.mxu0 0.0
        %1075 = vmatpush2.msra.mxu0 0.0
        %1076 = vmatprep.subr.mxu0 0.0
        %1077 = vmatpush2.msra.mxu0 0.0
        %1078 = vmatprep.subr.mxu0 0.0
        %1079 = vmatpush2.msra.mxu0 0.0
        %1080 = vmatprep.subr.mxu0 0.0
        %1081 = vmatpush2.msra.mxu0 0.0
        %1082 = vmatprep.subr.mxu0 0.0
        %1083 = vmatpush2.msra.mxu0 0.0
        %1084 = vmatprep.subr.mxu0 0.0
        %1085 = vmatpush2.msra.mxu0 0.0
        %1086 = vmatprep.subr.mxu0 0.0
        %1087 = vmatpush2.msra.mxu0 0.0
        %1088 = vmatprep.subr.mxu0 0.0
        %1089 = vmatpush2.msra.mxu0 0.0
        %1090 = vmatprep.subr.mxu0 0.0
        %1091 = vmatpush2.msra.mxu0 0.0
        %1092 = vmatprep.subr.mxu0 0.0
        %1093 = vmatpush2.msra.mxu0 0.0
        %1094 = vmatprep.subr.mxu0 0.0
        %1095 = vmatpush2.msra.mxu0 0.0
        %1096 = vmatprep.subr.mxu0 0.0
        %1097 = vmatpush2.msra.mxu0 0.0
        %1098 = vmatprep.subr.mxu0 0.0
        %1099 = vmatpush2.msra.mxu0 0.0
        %1100 = vmatprep.subr.mxu0 0.0
        %1101 = vmatpush2.msra.mxu0 0.0
        %1102 = vmatprep.subr.mxu0 0.0
        %1103 = vmatpush2.msra.mxu0 0.0
        %1104 = vmatprep.subr.mxu0 0.0
        %1105 = vmatpush2.msra.mxu0 0.0
        %1106 = vmatprep.mubr.f32.mxu0 0.0
        %1107 = vmatmul.mubr.f32.gmra.mxu0 %v1040
        %v1108 = vpop.f32.mrf.mxu0
        %v1109 = vadd.f32 0.0, %v1108
        %v1110 = vpop.f32.mrf.mxu0
        %1111 = vdwg.mxu0
        %v1112 = vadd.f32 %v1031, %v1109
        %v1113 = vld [vmem:[#allocation2 + $0x1a8] sm:$0xff]
        %v1114 = vld [vmem:[#allocation2 + $0x1b0] sm:$0xff]
        %v1115 = vld [vmem:[#allocation2 + $0x1b8] sm:$0xff]
        %v1116 = vld [vmem:[#allocation2 + $0x1c0] sm:$0xff]
        %vm1117 = vcmask 1044480
        %v1118 = vrot.slane %v867, 3
        %v1119 = vrot.slane 0.0, 3
        %v1120 = vsel %vm1117, %v1118, %v1119
        %v1121 = vsel %vm264, %v1120, 0
        %1123 = vmatprep.subr.mxu0 0.0
        %1124 = vmatpush1.msra.mxu0 0.0
        %1125 = vmatprep.subr.mxu0 0.0
        %1126 = vmatpush1.msra.mxu0 0.0
        %1127 = vmatprep.subr.mxu0 0.0
        %1128 = vmatpush1.msra.mxu0 0.0
        %1129 = vmatprep.subr.mxu0 0.0
        %1130 = vmatpush1.msra.mxu0 0.0
        %1131 = vmatprep.subr.mxu0 0.0
        %1132 = vmatpush1.msra.mxu0 0.0
        %1133 = vmatprep.subr.mxu0 0.0
        %1134 = vmatpush1.msra.mxu0 0.0
        %1135 = vmatprep.subr.mxu0 0.0
        %1136 = vmatpush1.msra.mxu0 0.0
        %1137 = vmatprep.subr.mxu0 0.0
        %1138 = vmatpush1.msra.mxu0 0.0
        %1139 = vmatprep.subr.mxu0 0.0
        %1140 = vmatpush1.msra.mxu0 0.0
        %1141 = vmatprep.subr.mxu0 0.0
        %1142 = vmatpush1.msra.mxu0 0.0
        %1143 = vmatprep.subr.mxu0 0.0
        %1144 = vmatpush1.msra.mxu0 0.0
        %1145 = vmatprep.subr.mxu0 0.0
        %1146 = vmatpush1.msra.mxu0 0.0
        %1147 = vmatprep.subr.mxu0 0.0
        %1148 = vmatpush1.msra.mxu0 %v1116
        %1149 = vmatprep.subr.mxu0 0.0
        %1150 = vmatpush1.msra.mxu0 %v1115
        %1151 = vmatprep.subr.mxu0 0.0
        %1152 = vmatpush1.msra.mxu0 %v1114
        %1153 = vmatprep.subr.mxu0 0.0
        %1154 = vmatpush1.msra.mxu0 %v1113
        %1155 = vmatprep.subr.mxu0 0.0
        %1156 = vmatpush2.msra.mxu0 0.0
        %1157 = vmatprep.subr.mxu0 0.0
        %1158 = vmatpush2.msra.mxu0 0.0
        %1159 = vmatprep.subr.mxu0 0.0
        %1160 = vmatpush2.msra.mxu0 0.0
        %1161 = vmatprep.subr.mxu0 0.0
        %1162 = vmatpush2.msra.mxu0 0.0
        %1163 = vmatprep.subr.mxu0 0.0
        %1164 = vmatpush2.msra.mxu0 0.0
        %1165 = vmatprep.subr.mxu0 0.0
        %1166 = vmatpush2.msra.mxu0 0.0
        %1167 = vmatprep.subr.mxu0 0.0
        %1168 = vmatpush2.msra.mxu0 0.0
        %1169 = vmatprep.subr.mxu0 0.0
        %1170 = vmatpush2.msra.mxu0 0.0
        %1171 = vmatprep.subr.mxu0 0.0
        %1172 = vmatpush2.msra.mxu0 0.0
        %1173 = vmatprep.subr.mxu0 0.0
        %1174 = vmatpush2.msra.mxu0 0.0
        %1175 = vmatprep.subr.mxu0 0.0
        %1176 = vmatpush2.msra.mxu0 0.0
        %1177 = vmatprep.subr.mxu0 0.0
        %1178 = vmatpush2.msra.mxu0 0.0
        %1179 = vmatprep.subr.mxu0 0.0
        %1180 = vmatpush2.msra.mxu0 0.0
        %1181 = vmatprep.subr.mxu0 0.0
        %1182 = vmatpush2.msra.mxu0 0.0
        %1183 = vmatprep.subr.mxu0 0.0
        %1184 = vmatpush2.msra.mxu0 0.0
        %1185 = vmatprep.subr.mxu0 0.0
        %1186 = vmatpush2.msra.mxu0 0.0
        %1187 = vmatprep.mubr.f32.mxu0 0.0
        %1188 = vmatmul.mubr.f32.gmra.mxu0 %v1121
        %v1189 = vpop.f32.mrf.mxu0
        %v1190 = vadd.f32 0.0, %v1189
        %v1191 = vpop.f32.mrf.mxu0
        %1192 = vdwg.mxu0
        %v1193 = vadd.f32 %v1112, %v1190
        %v1194 = vmax.f32 %v1193, 0.0
        %v1195 = vld [vmem:[#allocation2 + $0x1d0] sm:$0xff]
        %v1196 = vmul.f32 %v1194, %v1195
        %vm1197 = vcmask 97280
        %v1198 = vsel %vm1197, %v1196, -inf
        %v1199 = vrot.slane %v1198, 4
        %v1200 = vmax.f32 %v1198, %v1199
        %v1201 = vrot.slane %v1200, 2
        %v1202 = vmax.f32 %v1200, %v1201
        %v1203 = vrot.slane %v1202, 1
        %v1204 = vmax.f32 %v1202, %v1203
        %v1205 = vld [vmem:[#allocation2 + $0x1d8] sm:$0xff]
        %v1206 = vld [vmem:[#allocation2 + $0x1e0] sm:$0xf]
        %v1207 = vld [vmem:[#allocation2 + $0x1e4] sm:$0x1]
        %v1209 = vsel %vm1197, %v1204, 0
        %vm1211 = vcmask 1043456
        %v1213 = vsel %vm1211, %v1206, 0
        %1215 = vmatprep.subr.mxu0 0.0
        %1216 = vmatpush1.msra.mxu0 0.0
        %1217 = vmatprep.subr.mxu0 0.0
        %1218 = vmatpush1.msra.mxu0 0.0
        %1219 = vmatprep.subr.mxu0 0.0
        %1220 = vmatpush1.msra.mxu0 0.0
        %1221 = vmatprep.subr.mxu0 0.0
        %1222 = vmatpush1.msra.mxu0 0.0
        %1223 = vmatprep.subr.mxu0 0.0
        %1224 = vmatpush1.msra.mxu0 0.0
        %1225 = vmatprep.subr.mxu0 0.0
        %1226 = vmatpush1.msra.mxu0 0.0
        %1227 = vmatprep.subr.mxu0 0.0
        %1228 = vmatpush1.msra.mxu0 0.0
        %1229 = vmatprep.subr.mxu0 0.0
        %1230 = vmatpush1.msra.mxu0 0.0
        %1231 = vmatprep.subr.mxu0 0.0
        %1232 = vmatpush1.msra.mxu0 0.0
        %1233 = vmatprep.subr.mxu0 0.0
        %1234 = vmatpush1.msra.mxu0 0.0
        %1235 = vmatprep.subr.mxu0 0.0
        %1236 = vmatpush1.msra.mxu0 0.0
        %1237 = vmatprep.subr.mxu0 0.0
        %1238 = vmatpush1.msra.mxu0 0.0
        %1239 = vmatprep.subr.mxu0 0.0
        %1240 = vmatpush1.msra.mxu0 0.0
        %1241 = vmatprep.subr.mxu0 0.0
        %1242 = vmatpush1.msra.mxu0 0.0
        %1243 = vmatprep.subr.mxu0 0.0
        %1244 = vmatpush1.msra.mxu0 %v1213
        %1245 = vmatprep.subr.mxu0 0.0
        %1246 = vmatpush1.msra.mxu0 %v1205
        %1247 = vmatprep.subr.mxu0 0.0
        %1248 = vmatpush2.msra.mxu0 0.0
        %1249 = vmatprep.subr.mxu0 0.0
        %1250 = vmatpush2.msra.mxu0 0.0
        %1251 = vmatprep.subr.mxu0 0.0
        %1252 = vmatpush2.msra.mxu0 0.0
        %1253 = vmatprep.subr.mxu0 0.0
        %1254 = vmatpush2.msra.mxu0 0.0
        %1255 = vmatprep.subr.mxu0 0.0
        %1256 = vmatpush2.msra.mxu0 0.0
        %1257 = vmatprep.subr.mxu0 0.0
        %1258 = vmatpush2.msra.mxu0 0.0
        %1259 = vmatprep.subr.mxu0 0.0
        %1260 = vmatpush2.msra.mxu0 0.0
        %1261 = vmatprep.subr.mxu0 0.0
        %1262 = vmatpush2.msra.mxu0 0.0
        %1263 = vmatprep.subr.mxu0 0.0
        %1264 = vmatpush2.msra.mxu0 0.0
        %1265 = vmatprep.subr.mxu0 0.0
        %1266 = vmatpush2.msra.mxu0 0.0
        %1267 = vmatprep.subr.mxu0 0.0
        %1268 = vmatpush2.msra.mxu0 0.0
        %1269 = vmatprep.subr.mxu0 0.0
        %1270 = vmatpush2.msra.mxu0 0.0
        %1271 = vmatprep.subr.mxu0 0.0
        %1272 = vmatpush2.msra.mxu0 0.0
        %1273 = vmatprep.subr.mxu0 0.0
        %1274 = vmatpush2.msra.mxu0 0.0
        %1275 = vmatprep.subr.mxu0 0.0
        %1276 = vmatpush2.msra.mxu0 0.0
        %1277 = vmatprep.subr.mxu0 0.0
        %1278 = vmatpush2.msra.mxu0 0.0
        %1279 = vmatprep.mubr.f32.mxu0 0.0
        %1280 = vmatmul.mubr.f32.gmra.mxu0 %v1209
        %v1281 = vpop.f32.mrf.mxu0
        %v1282 = vadd.f32 %v1207, %v1281
        %v1283 = vpop.f32.mrf.mxu0
        %1284 = vdwg.mxu0
        %vm1285 = vcmask 8192
        %v1286 = vsel %vm1285, %v1282, -inf
        %1287 = vmax.xlane.f32.xlu0 %v1286
        %v1288 = vpop.xlane.xlu0 %1287
        %v1289 = vsub.f32 %v1282, %v1288
        %v1290 = vmul.f32 %v1289, 1.442695
        %v1291 = vpow.pop %v1290
        %v1292 = vsel %vm1285, %v1291, 0.0
        %1293 = vadd.xlane.f32.xlu0 %v1292
        %v1294 = vpop.xlane.xlu0 %1293
        %v1295 = vrcp.pop %v1294
        %v1296 = vmul.f32 %v1291, %v1295
        %vm1297 = vcmask 24592
        %v1298 = vsel %vm1297, %v1282, -inf
        %1299 = vmax.xlane.f32.xlu0 %v1298
        %v1300 = vpop.xlane.xlu0 %1299
        %v1301 = vsub.f32 %v1282, %v1300
        %v1302 = vmul.f32 %v1301, 1.442695
        %v1303 = vpow.pop %v1302
        %1305 = vrot.lane.b32.xlu0 %v1303, 126
        %v1306 = vpop.permute.xlu0 %1305
        %v1308 = vsel %vm1285, %v1306, 0.0
        %1309 = vadd.xlane.f32.xlu0 %v1308
        %v1310 = vpop.xlane.xlu0 %1309
        %v1311 = vrcp.pop %v1310
        %v1312 = vmul.f32 %v1303, %v1311
        %1314 = vrot.lane.b32.xlu0 %v1312, 126
        %v1315 = vpop.permute.xlu0 %1314
        %v1317 = vmul.f32 %v1296, %v1315
        %1318 = vrot.lane.b32.xlu0 %v1312, 125
        %v1319 = vpop.permute.xlu0 %1318
        %v1321 = vmul.f32 %v1296, %v1319
        %1322 = vrot.lane.b32.xlu0 %v1312, 127
        %v1323 = vpop.permute.xlu0 %1322
        %v1325 = vmul.f32 %v1296, %v1323
        %1327 = vrot.lane.b32.xlu0 %v1321, 1
        %v1328 = vpop.permute.xlu0 %1327
        %1331 = vrot.lane.b32.xlu0 %v1325, 1
        %v1332 = vpop.permute.xlu0 %1331
        %1335 = vrot.lane.b32.xlu0 %v1317, 2
        %v1336 = vpop.permute.xlu0 %1335
        %vm1338 = vcmask 7168
        %v1339 = vsel %vm1338, %v1317, %v1328
        %vm1340 = vcmask 15360
        %v1341 = vsel %vm1340, %v1339, %v1332
        %vm1342 = vcmask 23552
        %v1343 = vsel %vm1342, %v1341, %v1336
        %1345 = vrot.lane.b32.xlu0 %v1343, 4
        %v1346 = vpop.permute.xlu0 %1345
        %v1348 = vsel %vm1340, %v1296, %v1312
        %vm1349 = vcmask 31744
        %v1350 = vsel %vm1349, %v1348, %v1346
        %vm1351 = vcmask 57344
        %1352 = vst.msk [vmem:[%s151] sm:$0x1] %vm1351, %v1350
        %p1353 = scmp.lt.s32.totalorder %s14, 1
        %s1354 = scalar_select %p1353, %s14, 1
        %s1355 = scalar_lea.vmem %s2, %s1354
        // Predicated region
        $region33: #{forward.1} parent=27 // pred_check
          %p1356 = pneg %p79
        $region34: #{forward.1} parent=27 // pred_check_branch
          %1358 = sbr.rel (%p1356) target = $region36
        $region35: #{forward.1} parent=27 // pred_region
          _
        $region36: #{forward.1} parent=27 // pred_fallthru
          _
      $region28: #{forward.1} parent=5 // pred_fallthru
        _
      %p1359 = scmp.le.s32.totalorder 2, %s9
      // Predicated region
      $region37: #{forward.1} parent=5 // pred_check
        %p1360 = pneg %p1359
      $region38: #{forward.1} parent=5 // pred_check_branch
        %1362 = sbr.rel (%p1360) target = $region40
      $region39: #{forward.1} parent=5 // pred_region
        %s1363 = ssub.s32 %s9, 2
        // Predicated region
        $region41: #{forward.1} parent=39 // pred_check
          %p1364 = pneg %p85
        $region42: #{forward.1} parent=39 // pred_check_branch
          %1366 = sbr.rel (%p1364) target = $region44
        $region43: #{forward.1} parent=39 // pred_region
          %p1367 = scmp.lt.s32.totalorder %s15, 1
          %s1368 = scalar_select %p1367, %s15, 1
          %s1369 = scalar_lea.vmem %s2, %s1368
        $region44: #{forward.1} parent=39 // pred_fallthru
          _
      $region40: #{forward.1} parent=5 // pred_fallthru
        _
    $region6: #{forward.1} parent=1 // loop_footer
      %s13 = sadd.s32 1, %s9
    $region7: #{forward.1} parent=1 // loop_footer_branch
      %8 = sbr.rel target = $region3
    $region8: #{forward.1} parent=1 // loop_exit
      _
    %1370 = vsyncpa [#allocation3], 1
    %s1371 = scalar_lea.sflag [#allocation3], 1
    %1372 = vsyncpa %s1371, 1

</llo_original>
